<compile_context>
chip_gen: v7x
topology: tpu7x:2x2x1
jax: 0.10.0
libtpu: 0.0.40
codegen_flags: <defaults>
</compile_context>

<pallas_src>
import functools

import jax
import jax.numpy as jnp
from jax.experimental import pallas as pl
from jax.experimental.pallas import tpu as pltpu


def _round_up(x, m):
    return (x + m - 1) // m * m


# --------------------------------------------------------------------------- #
# Kernel
# --------------------------------------------------------------------------- #
def lstm_kernel(x_ref, w_ih_ref, w_hh_ref, b_ref, w_lin_ref, b_lin_ref,
                out_ref, *, hp):
    """Full LSTM recurrence + final Linear, entirely inside the kernel.

    x_ref     : (seq_len, input_size)  VMEM
    w_ih_ref  : (input_size, 4*hp)     VMEM   gate order: [i | f | o | g]
    w_hh_ref  : (hp, 4*hp)             VMEM   gate order: [i | f | o | g]
    b_ref     : (1, 4*hp)              VMEM   (b_ih + b_hh, zero padded)
    w_lin_ref : (hp, op)               VMEM
    b_lin_ref : (1, op)                VMEM
    out_ref   : (1, op)                VMEM
    """
    seq_len = x_ref.shape[0]

    # Hoisted input projection for ALL timesteps (single matmul, off the
    # serial recurrence critical path).  gates_x: (seq_len, 4*hp).
    gates_x = (jnp.dot(x_ref[...], w_ih_ref[...],
                       preferred_element_type=jnp.float32)
               + b_ref[...])

    # h / c carried as register values (no VMEM scratch round-trips).
    h = jnp.zeros((1, hp), jnp.float32)
    c = jnp.zeros((1, hp), jnp.float32)

    # seq_len is a trace-time constant -> fully unrolled recurrence.
    for t in range(seq_len):
        gates = gates_x[t:t + 1, :] + jnp.dot(
            h, w_hh_ref[...], preferred_element_type=jnp.float32)   # (1, 4*hp)
        sfo = jax.nn.sigmoid(gates[:, 0:3 * hp])     # one fused sigmoid (i,f,o)
        i_g = sfo[:, 0 * hp:1 * hp]
        f_g = sfo[:, 1 * hp:2 * hp]
        o_g = sfo[:, 2 * hp:3 * hp]
        g_g = jnp.tanh(gates[:, 3 * hp:4 * hp])      # single tanh (g)
        c = f_g * c + i_g * g_g
        h = o_g * jnp.tanh(c)

    out_ref[...] = (jnp.dot(h, w_lin_ref[...],
                            preferred_element_type=jnp.float32)
                    + b_lin_ref[...])


# --------------------------------------------------------------------------- #
# One-time parameter repacking (out of the per-call hot path)
# --------------------------------------------------------------------------- #
def pack_lstm_params(w_ih, w_hh, b_ih, b_hh, w_lin, b_lin,
                     hidden_size, output_size):
    """Repack PyTorch-layout params into lane-padded, transposed blocks.

    PyTorch gate row order is [i | f | g | o]; we repack columns to
    [i | f | o | g] so the kernel can apply one sigmoid over the first 3*hp
    lanes.  Padded hidden lanes stay exactly 0 through the recurrence
    (gates=0 there => c stays 0, h = 0.5*tanh(0) = 0) and the padded w_lin
    rows are zero, so the final Linear is unaffected.
    """
    H = hidden_size
    hp = _round_up(H, 128)
    op = _round_up(output_size, 128)

    def split(w):  # -> i, f, g, o row blocks
        return w[0:H], w[H:2 * H], w[2 * H:3 * H], w[3 * H:4 * H]

    def pack_cols(blocks, pad_rows):
        cols = [jnp.pad(b.T, ((0, pad_rows), (0, hp - H))) for b in blocks]
        return jnp.concatenate(cols, axis=1)

    wi, wf, wg, wo = split(w_ih)
    w_ih_p = pack_cols([wi, wf, wo, wg], pad_rows=0)          # (in, 4*hp)
    hi, hf, hg, ho = split(w_hh)
    w_hh_p = pack_cols([hi, hf, ho, hg], pad_rows=hp - H)     # (hp, 4*hp)

    b = b_ih + b_hh
    bi, bf, bg, bo = b[0:H], b[H:2 * H], b[2 * H:3 * H], b[3 * H:4 * H]
    b_p = jnp.concatenate(
        [jnp.pad(v, (0, hp - H)) for v in (bi, bf, bo, bg)])[None, :]  # (1,4hp)

    w_lin_p = jnp.pad(w_lin.T, ((0, hp - H), (0, op - output_size)))   # (hp,op)
    b_lin_p = jnp.pad(b_lin, (0, op - output_size))[None, :]           # (1,op)

    return (w_ih_p, w_hh_p, b_p, w_lin_p, b_lin_p), hp, op


# --------------------------------------------------------------------------- #
# Forward wrapper (packed params)
# --------------------------------------------------------------------------- #
def lstm_forward(x, packed, hp, op, output_size):
    """x: (seq_len, input_size) f32. Returns preds[-1]: (output_size,)."""
    w_ih_p, w_hh_p, b_p, w_lin_p, b_lin_p = packed

    vmem = pl.BlockSpec(memory_space=pltpu.MemorySpace.VMEM)
    out = pl.pallas_call(
        functools.partial(lstm_kernel, hp=hp),
        out_shape=jax.ShapeDtypeStruct((1, op), jnp.float32),
        in_specs=[vmem] * 6,
        out_specs=vmem,
    )(x, w_ih_p, w_hh_p, b_p, w_lin_p, b_lin_p)

    return out[0, :output_size]


# --------------------------------------------------------------------------- #
# Pure-JAX reference (matches torch.nn.LSTM + Linear, preds[-1])
# --------------------------------------------------------------------------- #
def lstm_ref(x, w_ih, w_hh, b_ih, b_hh, w_lin, b_lin, hidden_size):
    H = hidden_size
    h = jnp.zeros((H,), jnp.float32)
    c = jnp.zeros((H,), jnp.float32)
    for t in range(x.shape[0]):
        gates = w_ih @ x[t] + b_ih + w_hh @ h + b_hh
        i_g = jax.nn.sigmoid(gates[0:H])
        f_g = jax.nn.sigmoid(gates[H:2 * H])
        g_g = jnp.tanh(gates[2 * H:3 * H])
        o_g = jax.nn.sigmoid(gates[3 * H:4 * H])
        c = f_g * c + i_g * g_g
        h = o_g * jnp.tanh(c)
    return w_lin @ h + b_lin


if __name__ == "__main__":
    input_size, hidden_size, output_size = 1, 100, 1
    seq_len = 8

    key = jax.random.PRNGKey(0)
    kx, k1, k2, k3, k4, k5, k6 = jax.random.split(key, 7)

    # input_seq is a length-`seq_len` sequence; .view(len, 1, -1) -> (seq, 1, 1)
    x_seq = jax.random.normal(kx, (seq_len,), dtype=jnp.float32)
    x = x_seq.reshape(seq_len, input_size)

    # Deterministic parameter init (PyTorch-style U(-1/sqrt(H), 1/sqrt(H))).
    stdv = 1.0 / jnp.sqrt(jnp.float32(hidden_size))
    w_ih = jax.random.uniform(k1, (4 * hidden_size, input_size),
                              minval=-stdv, maxval=stdv, dtype=jnp.float32)
    w_hh = jax.random.uniform(k2, (4 * hidden_size, hidden_size),
                              minval=-stdv, maxval=stdv, dtype=jnp.float32)
    b_ih = jax.random.uniform(k3, (4 * hidden_size,),
                              minval=-stdv, maxval=stdv, dtype=jnp.float32)
    b_hh = jax.random.uniform(k4, (4 * hidden_size,),
                              minval=-stdv, maxval=stdv, dtype=jnp.float32)
    w_lin = jax.random.uniform(k5, (output_size, hidden_size),
                               minval=-stdv, maxval=stdv, dtype=jnp.float32)
    b_lin = jax.random.uniform(k6, (output_size,),
                               minval=-stdv, maxval=stdv, dtype=jnp.float32)

    # Pack parameters ONCE (outside the per-call hot path).
    packed, hp, op = pack_lstm_params(w_ih, w_hh, b_ih, b_hh, w_lin, b_lin,
                                      hidden_size, output_size)
    packed = jax.block_until_ready(packed)

    pred = lstm_forward(x, packed, hp, op, output_size)
    pred = jax.block_until_ready(pred)

    ref = lstm_ref(x, w_ih, w_hh, b_ih, b_hh, w_lin, b_lin, hidden_size)
    assert pred.shape == (output_size,)
    assert jnp.allclose(pred, ref, atol=1e-4, rtol=1e-4), (pred, ref)

    print("KERNEL_OK")
</pallas_src>

<mosaic_0001>
module attributes {stable_mosaic.version = 11 : i64} {
  func.func @lstm_kernel(%arg0: memref<8x1xf32, #tpu.memory_space<vmem>>, %arg1: memref<1x512xf32, #tpu.memory_space<vmem>>, %arg2: memref<128x512xf32, #tpu.memory_space<vmem>>, %arg3: memref<1x512xf32, #tpu.memory_space<vmem>>, %arg4: memref<128x128xf32, #tpu.memory_space<vmem>>, %arg5: memref<1x128xf32, #tpu.memory_space<vmem>>, %arg6: memref<1x128xf32, #tpu.memory_space<vmem>>) attributes {dimension_semantics = [], scalar_prefetch = 0 : i64, scratch_operands = 0 : i64, tpu.core_type = #tpu.core_type<tc>} {
    %c0 = arith.constant 0 : index
    %c0_0 = arith.constant 0 : index
    %0 = vector.load %arg0[%c0, %c0_0] : memref<8x1xf32, #tpu.memory_space<vmem>>, vector<8x1xf32>
    %c0_1 = arith.constant 0 : index
    %c0_2 = arith.constant 0 : index
    %1 = vector.load %arg1[%c0_1, %c0_2] : memref<1x512xf32, #tpu.memory_space<vmem>>, vector<1x512xf32>
    %cst = arith.constant dense<0.000000e+00> : vector<8x512xf32>
    %2 = tpu.matmul %0, %1, %cst {dimension_numbers = #tpu.dot_dimension_numbers<[1], [0], [0], [1], [0, 0, 1, 1], [], []>} : vector<8x1xf32>, vector<1x512xf32>, vector<8x512xf32> -> vector<8x512xf32>
    %c0_3 = arith.constant 0 : index
    %c0_4 = arith.constant 0 : index
    %3 = vector.load %arg3[%c0_3, %c0_4] : memref<1x512xf32, #tpu.memory_space<vmem>>, vector<1x512xf32>
    %4 = vector.broadcast %3 : vector<1x512xf32> to vector<8x512xf32>
    %5 = arith.addf %2, %4 : vector<8x512xf32>
    %cst_5 = arith.constant 0.000000e+00 : f32
    %6 = vector.broadcast %cst_5 : f32 to vector<1x128xf32>
    %cst_6 = arith.constant 0.000000e+00 : f32
    %7 = vector.broadcast %cst_6 : f32 to vector<1x128xf32>
    %8 = vector.extract_strided_slice %5 {offsets = [0, 0], sizes = [1, 512], strides = [1, 1]} : vector<8x512xf32> to vector<1x512xf32>
    %c0_7 = arith.constant 0 : index
    %c0_8 = arith.constant 0 : index
    %9 = vector.load %arg2[%c0_7, %c0_8] : memref<128x512xf32, #tpu.memory_space<vmem>>, vector<128x512xf32>
    %cst_9 = arith.constant dense<0.000000e+00> : vector<1x512xf32>
    %10 = tpu.matmul %6, %9, %cst_9 {dimension_numbers = #tpu.dot_dimension_numbers<[1], [0], [0], [1], [0, 0, 1, 1], [], []>} : vector<1x128xf32>, vector<128x512xf32>, vector<1x512xf32> -> vector<1x512xf32>
    %11 = arith.addf %8, %10 : vector<1x512xf32>
    %12 = vector.extract_strided_slice %11 {offsets = [0, 0], sizes = [1, 384], strides = [1, 1]} : vector<1x512xf32> to vector<1x384xf32>
    %13 = arith.negf %12 : vector<1x384xf32>
    %14 = math.exp %13 : vector<1x384xf32>
    %cst_10 = arith.constant 1.000000e+00 : f32
    %15 = vector.broadcast %cst_10 : f32 to vector<1x384xf32>
    %16 = arith.addf %15, %14 : vector<1x384xf32>
    %17 = arith.divf %15, %16 : vector<1x384xf32>
    %18 = vector.extract_strided_slice %17 {offsets = [0, 0], sizes = [1, 128], strides = [1, 1]} : vector<1x384xf32> to vector<1x128xf32>
    %19 = vector.extract_strided_slice %17 {offsets = [0, 128], sizes = [1, 128], strides = [1, 1]} : vector<1x384xf32> to vector<1x128xf32>
    %20 = vector.extract_strided_slice %17 {offsets = [0, 256], sizes = [1, 128], strides = [1, 1]} : vector<1x384xf32> to vector<1x128xf32>
    %21 = vector.extract_strided_slice %11 {offsets = [0, 384], sizes = [1, 128], strides = [1, 1]} : vector<1x512xf32> to vector<1x128xf32>
    %22 = math.tanh %21 : vector<1x128xf32>
    %23 = arith.mulf %19, %7 : vector<1x128xf32>
    %24 = arith.mulf %18, %22 : vector<1x128xf32>
    %25 = arith.addf %23, %24 : vector<1x128xf32>
    %26 = math.tanh %25 : vector<1x128xf32>
    %27 = arith.mulf %20, %26 : vector<1x128xf32>
    %28 = vector.extract_strided_slice %5 {offsets = [1, 0], sizes = [1, 512], strides = [1, 1]} : vector<8x512xf32> to vector<1x512xf32>
    %c0_11 = arith.constant 0 : index
    %c0_12 = arith.constant 0 : index
    %29 = vector.load %arg2[%c0_11, %c0_12] : memref<128x512xf32, #tpu.memory_space<vmem>>, vector<128x512xf32>
    %cst_13 = arith.constant dense<0.000000e+00> : vector<1x512xf32>
    %30 = tpu.matmul %27, %29, %cst_13 {dimension_numbers = #tpu.dot_dimension_numbers<[1], [0], [0], [1], [0, 0, 1, 1], [], []>} : vector<1x128xf32>, vector<128x512xf32>, vector<1x512xf32> -> vector<1x512xf32>
    %31 = arith.addf %28, %30 : vector<1x512xf32>
    %32 = vector.extract_strided_slice %31 {offsets = [0, 0], sizes = [1, 384], strides = [1, 1]} : vector<1x512xf32> to vector<1x384xf32>
    %33 = arith.negf %32 : vector<1x384xf32>
    %34 = math.exp %33 : vector<1x384xf32>
    %cst_14 = arith.constant 1.000000e+00 : f32
    %35 = vector.broadcast %cst_14 : f32 to vector<1x384xf32>
    %36 = arith.addf %35, %34 : vector<1x384xf32>
    %37 = arith.divf %35, %36 : vector<1x384xf32>
    %38 = vector.extract_strided_slice %37 {offsets = [0, 0], sizes = [1, 128], strides = [1, 1]} : vector<1x384xf32> to vector<1x128xf32>
    %39 = vector.extract_strided_slice %37 {offsets = [0, 128], sizes = [1, 128], strides = [1, 1]} : vector<1x384xf32> to vector<1x128xf32>
    %40 = vector.extract_strided_slice %37 {offsets = [0, 256], sizes = [1, 128], strides = [1, 1]} : vector<1x384xf32> to vector<1x128xf32>
    %41 = vector.extract_strided_slice %31 {offsets = [0, 384], sizes = [1, 128], strides = [1, 1]} : vector<1x512xf32> to vector<1x128xf32>
    %42 = math.tanh %41 : vector<1x128xf32>
    %43 = arith.mulf %39, %25 : vector<1x128xf32>
    %44 = arith.mulf %38, %42 : vector<1x128xf32>
    %45 = arith.addf %43, %44 : vector<1x128xf32>
    %46 = math.tanh %45 : vector<1x128xf32>
    %47 = arith.mulf %40, %46 : vector<1x128xf32>
    %48 = vector.extract_strided_slice %5 {offsets = [2, 0], sizes = [1, 512], strides = [1, 1]} : vector<8x512xf32> to vector<1x512xf32>
    %c0_15 = arith.constant 0 : index
    %c0_16 = arith.constant 0 : index
    %49 = vector.load %arg2[%c0_15, %c0_16] : memref<128x512xf32, #tpu.memory_space<vmem>>, vector<128x512xf32>
    %cst_17 = arith.constant dense<0.000000e+00> : vector<1x512xf32>
    %50 = tpu.matmul %47, %49, %cst_17 {dimension_numbers = #tpu.dot_dimension_numbers<[1], [0], [0], [1], [0, 0, 1, 1], [], []>} : vector<1x128xf32>, vector<128x512xf32>, vector<1x512xf32> -> vector<1x512xf32>
    %51 = arith.addf %48, %50 : vector<1x512xf32>
    %52 = vector.extract_strided_slice %51 {offsets = [0, 0], sizes = [1, 384], strides = [1, 1]} : vector<1x512xf32> to vector<1x384xf32>
    %53 = arith.negf %52 : vector<1x384xf32>
    %54 = math.exp %53 : vector<1x384xf32>
    %cst_18 = arith.constant 1.000000e+00 : f32
    %55 = vector.broadcast %cst_18 : f32 to vector<1x384xf32>
    %56 = arith.addf %55, %54 : vector<1x384xf32>
    %57 = arith.divf %55, %56 : vector<1x384xf32>
    %58 = vector.extract_strided_slice %57 {offsets = [0, 0], sizes = [1, 128], strides = [1, 1]} : vector<1x384xf32> to vector<1x128xf32>
    %59 = vector.extract_strided_slice %57 {offsets = [0, 128], sizes = [1, 128], strides = [1, 1]} : vector<1x384xf32> to vector<1x128xf32>
    %60 = vector.extract_strided_slice %57 {offsets = [0, 256], sizes = [1, 128], strides = [1, 1]} : vector<1x384xf32> to vector<1x128xf32>
    %61 = vector.extract_strided_slice %51 {offsets = [0, 384], sizes = [1, 128], strides = [1, 1]} : vector<1x512xf32> to vector<1x128xf32>
    %62 = math.tanh %61 : vector<1x128xf32>
    %63 = arith.mulf %59, %45 : vector<1x128xf32>
    %64 = arith.mulf %58, %62 : vector<1x128xf32>
    %65 = arith.addf %63, %64 : vector<1x128xf32>
    %66 = math.tanh %65 : vector<1x128xf32>
    %67 = arith.mulf %60, %66 : vector<1x128xf32>
    %68 = vector.extract_strided_slice %5 {offsets = [3, 0], sizes = [1, 512], strides = [1, 1]} : vector<8x512xf32> to vector<1x512xf32>
    %c0_19 = arith.constant 0 : index
    %c0_20 = arith.constant 0 : index
    %69 = vector.load %arg2[%c0_19, %c0_20] : memref<128x512xf32, #tpu.memory_space<vmem>>, vector<128x512xf32>
    %cst_21 = arith.constant dense<0.000000e+00> : vector<1x512xf32>
    %70 = tpu.matmul %67, %69, %cst_21 {dimension_numbers = #tpu.dot_dimension_numbers<[1], [0], [0], [1], [0, 0, 1, 1], [], []>} : vector<1x128xf32>, vector<128x512xf32>, vector<1x512xf32> -> vector<1x512xf32>
    %71 = arith.addf %68, %70 : vector<1x512xf32>
    %72 = vector.extract_strided_slice %71 {offsets = [0, 0], sizes = [1, 384], strides = [1, 1]} : vector<1x512xf32> to vector<1x384xf32>
    %73 = arith.negf %72 : vector<1x384xf32>
    %74 = math.exp %73 : vector<1x384xf32>
    %cst_22 = arith.constant 1.000000e+00 : f32
    %75 = vector.broadcast %cst_22 : f32 to vector<1x384xf32>
    %76 = arith.addf %75, %74 : vector<1x384xf32>
    %77 = arith.divf %75, %76 : vector<1x384xf32>
    %78 = vector.extract_strided_slice %77 {offsets = [0, 0], sizes = [1, 128], strides = [1, 1]} : vector<1x384xf32> to vector<1x128xf32>
    %79 = vector.extract_strided_slice %77 {offsets = [0, 128], sizes = [1, 128], strides = [1, 1]} : vector<1x384xf32> to vector<1x128xf32>
    %80 = vector.extract_strided_slice %77 {offsets = [0, 256], sizes = [1, 128], strides = [1, 1]} : vector<1x384xf32> to vector<1x128xf32>
    %81 = vector.extract_strided_slice %71 {offsets = [0, 384], sizes = [1, 128], strides = [1, 1]} : vector<1x512xf32> to vector<1x128xf32>
    %82 = math.tanh %81 : vector<1x128xf32>
    %83 = arith.mulf %79, %65 : vector<1x128xf32>
    %84 = arith.mulf %78, %82 : vector<1x128xf32>
    %85 = arith.addf %83, %84 : vector<1x128xf32>
    %86 = math.tanh %85 : vector<1x128xf32>
    %87 = arith.mulf %80, %86 : vector<1x128xf32>
    %88 = vector.extract_strided_slice %5 {offsets = [4, 0], sizes = [1, 512], strides = [1, 1]} : vector<8x512xf32> to vector<1x512xf32>
    %c0_23 = arith.constant 0 : index
    %c0_24 = arith.constant 0 : index
    %89 = vector.load %arg2[%c0_23, %c0_24] : memref<128x512xf32, #tpu.memory_space<vmem>>, vector<128x512xf32>
    %cst_25 = arith.constant dense<0.000000e+00> : vector<1x512xf32>
    %90 = tpu.matmul %87, %89, %cst_25 {dimension_numbers = #tpu.dot_dimension_numbers<[1], [0], [0], [1], [0, 0, 1, 1], [], []>} : vector<1x128xf32>, vector<128x512xf32>, vector<1x512xf32> -> vector<1x512xf32>
    %91 = arith.addf %88, %90 : vector<1x512xf32>
    %92 = vector.extract_strided_slice %91 {offsets = [0, 0], sizes = [1, 384], strides = [1, 1]} : vector<1x512xf32> to vector<1x384xf32>
    %93 = arith.negf %92 : vector<1x384xf32>
    %94 = math.exp %93 : vector<1x384xf32>
    %cst_26 = arith.constant 1.000000e+00 : f32
    %95 = vector.broadcast %cst_26 : f32 to vector<1x384xf32>
    %96 = arith.addf %95, %94 : vector<1x384xf32>
    %97 = arith.divf %95, %96 : vector<1x384xf32>
    %98 = vector.extract_strided_slice %97 {offsets = [0, 0], sizes = [1, 128], strides = [1, 1]} : vector<1x384xf32> to vector<1x128xf32>
    %99 = vector.extract_strided_slice %97 {offsets = [0, 128], sizes = [1, 128], strides = [1, 1]} : vector<1x384xf32> to vector<1x128xf32>
    %100 = vector.extract_strided_slice %97 {offsets = [0, 256], sizes = [1, 128], strides = [1, 1]} : vector<1x384xf32> to vector<1x128xf32>
    %101 = vector.extract_strided_slice %91 {offsets = [0, 384], sizes = [1, 128], strides = [1, 1]} : vector<1x512xf32> to vector<1x128xf32>
    %102 = math.tanh %101 : vector<1x128xf32>
    %103 = arith.mulf %99, %85 : vector<1x128xf32>
    %104 = arith.mulf %98, %102 : vector<1x128xf32>
    %105 = arith.addf %103, %104 : vector<1x128xf32>
    %106 = math.tanh %105 : vector<1x128xf32>
    %107 = arith.mulf %100, %106 : vector<1x128xf32>
    %108 = vector.extract_strided_slice %5 {offsets = [5, 0], sizes = [1, 512], strides = [1, 1]} : vector<8x512xf32> to vector<1x512xf32>
    %c0_27 = arith.constant 0 : index
    %c0_28 = arith.constant 0 : index
    %109 = vector.load %arg2[%c0_27, %c0_28] : memref<128x512xf32, #tpu.memory_space<vmem>>, vector<128x512xf32>
    %cst_29 = arith.constant dense<0.000000e+00> : vector<1x512xf32>
    %110 = tpu.matmul %107, %109, %cst_29 {dimension_numbers = #tpu.dot_dimension_numbers<[1], [0], [0], [1], [0, 0, 1, 1], [], []>} : vector<1x128xf32>, vector<128x512xf32>, vector<1x512xf32> -> vector<1x512xf32>
    %111 = arith.addf %108, %110 : vector<1x512xf32>
    %112 = vector.extract_strided_slice %111 {offsets = [0, 0], sizes = [1, 384], strides = [1, 1]} : vector<1x512xf32> to vector<1x384xf32>
    %113 = arith.negf %112 : vector<1x384xf32>
    %114 = math.exp %113 : vector<1x384xf32>
    %cst_30 = arith.constant 1.000000e+00 : f32
    %115 = vector.broadcast %cst_30 : f32 to vector<1x384xf32>
    %116 = arith.addf %115, %114 : vector<1x384xf32>
    %117 = arith.divf %115, %116 : vector<1x384xf32>
    %118 = vector.extract_strided_slice %117 {offsets = [0, 0], sizes = [1, 128], strides = [1, 1]} : vector<1x384xf32> to vector<1x128xf32>
    %119 = vector.extract_strided_slice %117 {offsets = [0, 128], sizes = [1, 128], strides = [1, 1]} : vector<1x384xf32> to vector<1x128xf32>
    %120 = vector.extract_strided_slice %117 {offsets = [0, 256], sizes = [1, 128], strides = [1, 1]} : vector<1x384xf32> to vector<1x128xf32>
    %121 = vector.extract_strided_slice %111 {offsets = [0, 384], sizes = [1, 128], strides = [1, 1]} : vector<1x512xf32> to vector<1x128xf32>
    %122 = math.tanh %121 : vector<1x128xf32>
    %123 = arith.mulf %119, %105 : vector<1x128xf32>
    %124 = arith.mulf %118, %122 : vector<1x128xf32>
    %125 = arith.addf %123, %124 : vector<1x128xf32>
    %126 = math.tanh %125 : vector<1x128xf32>
    %127 = arith.mulf %120, %126 : vector<1x128xf32>
    %128 = vector.extract_strided_slice %5 {offsets = [6, 0], sizes = [1, 512], strides = [1, 1]} : vector<8x512xf32> to vector<1x512xf32>
    %c0_31 = arith.constant 0 : index
    %c0_32 = arith.constant 0 : index
    %129 = vector.load %arg2[%c0_31, %c0_32] : memref<128x512xf32, #tpu.memory_space<vmem>>, vector<128x512xf32>
    %cst_33 = arith.constant dense<0.000000e+00> : vector<1x512xf32>
    %130 = tpu.matmul %127, %129, %cst_33 {dimension_numbers = #tpu.dot_dimension_numbers<[1], [0], [0], [1], [0, 0, 1, 1], [], []>} : vector<1x128xf32>, vector<128x512xf32>, vector<1x512xf32> -> vector<1x512xf32>
    %131 = arith.addf %128, %130 : vector<1x512xf32>
    %132 = vector.extract_strided_slice %131 {offsets = [0, 0], sizes = [1, 384], strides = [1, 1]} : vector<1x512xf32> to vector<1x384xf32>
    %133 = arith.negf %132 : vector<1x384xf32>
    %134 = math.exp %133 : vector<1x384xf32>
    %cst_34 = arith.constant 1.000000e+00 : f32
    %135 = vector.broadcast %cst_34 : f32 to vector<1x384xf32>
    %136 = arith.addf %135, %134 : vector<1x384xf32>
    %137 = arith.divf %135, %136 : vector<1x384xf32>
    %138 = vector.extract_strided_slice %137 {offsets = [0, 0], sizes = [1, 128], strides = [1, 1]} : vector<1x384xf32> to vector<1x128xf32>
    %139 = vector.extract_strided_slice %137 {offsets = [0, 128], sizes = [1, 128], strides = [1, 1]} : vector<1x384xf32> to vector<1x128xf32>
    %140 = vector.extract_strided_slice %137 {offsets = [0, 256], sizes = [1, 128], strides = [1, 1]} : vector<1x384xf32> to vector<1x128xf32>
    %141 = vector.extract_strided_slice %131 {offsets = [0, 384], sizes = [1, 128], strides = [1, 1]} : vector<1x512xf32> to vector<1x128xf32>
    %142 = math.tanh %141 : vector<1x128xf32>
    %143 = arith.mulf %139, %125 : vector<1x128xf32>
    %144 = arith.mulf %138, %142 : vector<1x128xf32>
    %145 = arith.addf %143, %144 : vector<1x128xf32>
    %146 = math.tanh %145 : vector<1x128xf32>
    %147 = arith.mulf %140, %146 : vector<1x128xf32>
    %148 = vector.extract_strided_slice %5 {offsets = [7, 0], sizes = [1, 512], strides = [1, 1]} : vector<8x512xf32> to vector<1x512xf32>
    %c0_35 = arith.constant 0 : index
    %c0_36 = arith.constant 0 : index
    %149 = vector.load %arg2[%c0_35, %c0_36] : memref<128x512xf32, #tpu.memory_space<vmem>>, vector<128x512xf32>
    %cst_37 = arith.constant dense<0.000000e+00> : vector<1x512xf32>
    %150 = tpu.matmul %147, %149, %cst_37 {dimension_numbers = #tpu.dot_dimension_numbers<[1], [0], [0], [1], [0, 0, 1, 1], [], []>} : vector<1x128xf32>, vector<128x512xf32>, vector<1x512xf32> -> vector<1x512xf32>
    %151 = arith.addf %148, %150 : vector<1x512xf32>
    %152 = vector.extract_strided_slice %151 {offsets = [0, 0], sizes = [1, 384], strides = [1, 1]} : vector<1x512xf32> to vector<1x384xf32>
    %153 = arith.negf %152 : vector<1x384xf32>
    %154 = math.exp %153 : vector<1x384xf32>
    %cst_38 = arith.constant 1.000000e+00 : f32
    %155 = vector.broadcast %cst_38 : f32 to vector<1x384xf32>
    %156 = arith.addf %155, %154 : vector<1x384xf32>
    %157 = arith.divf %155, %156 : vector<1x384xf32>
    %158 = vector.extract_strided_slice %157 {offsets = [0, 0], sizes = [1, 128], strides = [1, 1]} : vector<1x384xf32> to vector<1x128xf32>
    %159 = vector.extract_strided_slice %157 {offsets = [0, 128], sizes = [1, 128], strides = [1, 1]} : vector<1x384xf32> to vector<1x128xf32>
    %160 = vector.extract_strided_slice %157 {offsets = [0, 256], sizes = [1, 128], strides = [1, 1]} : vector<1x384xf32> to vector<1x128xf32>
    %161 = vector.extract_strided_slice %151 {offsets = [0, 384], sizes = [1, 128], strides = [1, 1]} : vector<1x512xf32> to vector<1x128xf32>
    %162 = math.tanh %161 : vector<1x128xf32>
    %163 = arith.mulf %159, %145 : vector<1x128xf32>
    %164 = arith.mulf %158, %162 : vector<1x128xf32>
    %165 = arith.addf %163, %164 : vector<1x128xf32>
    %166 = math.tanh %165 : vector<1x128xf32>
    %167 = arith.mulf %160, %166 : vector<1x128xf32>
    %c0_39 = arith.constant 0 : index
    %c0_40 = arith.constant 0 : index
    %168 = vector.load %arg4[%c0_39, %c0_40] : memref<128x128xf32, #tpu.memory_space<vmem>>, vector<128x128xf32>
    %cst_41 = arith.constant dense<0.000000e+00> : vector<1x128xf32>
    %169 = tpu.matmul %167, %168, %cst_41 {dimension_numbers = #tpu.dot_dimension_numbers<[1], [0], [0], [1], [0, 0, 1, 1], [], []>} : vector<1x128xf32>, vector<128x128xf32>, vector<1x128xf32> -> vector<1x128xf32>
    %c0_42 = arith.constant 0 : index
    %c0_43 = arith.constant 0 : index
    %170 = vector.load %arg5[%c0_42, %c0_43] : memref<1x128xf32, #tpu.memory_space<vmem>>, vector<1x128xf32>
    %171 = arith.addf %169, %170 : vector<1x128xf32>
    %c0_44 = arith.constant 0 : index
    %c0_45 = arith.constant 0 : index
    %172 = vector.load %arg6[%c0_44, %c0_45] : memref<1x128xf32, #tpu.memory_space<vmem>>, vector<1x128xf32>
    tpu.vector_store %arg6[%c0_44, %c0_45], %171 {strides = array<i32>} : memref<1x128xf32, #tpu.memory_space<vmem>>, vector<1x128xf32>,
    return
  }
}

</mosaic_0001>

<llo_original>
// kernel: tpu_custom_call.1
$region0: #{tpu_custom_call.1}
  #allocation0 [shape = 'u32[]', space=smem, size = 0x4, offset = 0x4, fixed_abs, tag = 'smem constant byte address 0x4 - core index']
  #allocation1 [shape = 'u32[144,128]{1,0:T(1,128)}', space=vmem, size = 0x12000, scoped, tag = 'internal scratch']
  %s0 = inlined_call_operand.vmem [shape: f32[8,1], index: 0, kind: input, shape index: {}]
  %s1 = inlined_call_operand.vmem [shape: f32[1,512], index: 1, kind: input, shape index: {}]
  %s2 = inlined_call_operand.hbm [shape: f32[128,512], index: 2, kind: input, shape index: {}]
  %s3 = inlined_call_operand.vmem [shape: f32[1,512], index: 3, kind: input, shape index: {}]
  %s4 = inlined_call_operand.hbm [shape: f32[128,128], index: 4, kind: input, shape index: {}]
  %s5 = inlined_call_operand.vmem [shape: f32[1,128], index: 5, kind: input, shape index: {}]
  %s6 = inlined_call_operand.hbm [shape: f32[1,128], index: 6, kind: output, shape index: {}]
  %s7 = sld [smem:[#allocation0]]
  $region42: #{tpu_custom_call.1} parent=0
    _
  %s9 = ssub.s32 1, %s7
  %s10 = scalar_select 0, %s9, %s7
  $region1: #{tpu_custom_call.1} parent=0
    #allocation2 [shape = 'u8[262144]{0}', space=vmem, size = 0x40000, scoped, tag = 'input window, operand 2, single buffered']
    #allocation3 [shape = 's32[1]{0}', space=sflag, size = 0x4, scoped, tag = 'scoped memory for tpu_custom_call.1']
    #allocation4 [shape = 's32[1]{0}', space=sflag, size = 0x4, scoped, tag = 'scoped memory for tpu_custom_call.1']
    #allocation5 [shape = 'u8[65536]{0}', space=vmem, size = 0x10000, scoped, tag = 'input window, operand 4, single buffered']
    #allocation6 [shape = 's32[1]{0}', space=sflag, size = 0x4, scoped, tag = 'scoped memory for tpu_custom_call.1']
    #allocation7 [shape = 'u8[512]{0}', space=vmem, size = 0x400, scoped, tag = 'output window, operand 0, single buffered']
    %11 = vsyncpa [#allocation3], 0
    %12 = vsyncpa [#allocation6], 0
    %13 = vsyncpa [#allocation4], 0
    // Predicated region
    $region2: #{tpu_custom_call.1} parent=1 // pred_check
      _
    $region3: #{tpu_custom_call.1} parent=1 // pred_check_branch
      %15 = sbr.rel (0) target = $region5
    $region4: #{tpu_custom_call.1} parent=1 // pred_region
      _
    $region5: #{tpu_custom_call.1} parent=1 // pred_fallthru
      _
    // Predicated region
    $region6: #{tpu_custom_call.1} parent=1 // pred_check
      _
    $region7: #{tpu_custom_call.1} parent=1 // pred_check_branch
      %17 = sbr.rel (0) target = $region9
    $region8: #{tpu_custom_call.1} parent=1 // pred_region
      _
    $region9: #{tpu_custom_call.1} parent=1 // pred_fallthru
      _
    // Predicated region
    $region10: #{tpu_custom_call.1} parent=1 // pred_check
      _
    $region11: #{tpu_custom_call.1} parent=1 // pred_check_branch
      %19 = sbr.rel (0) target = $region13
    $region12: #{tpu_custom_call.1} parent=1 // pred_region
      %s21 = ssub.s32 8192, 8192
      %22 = vsyncadd [#allocation3], %s21
      %s23 = sshll.u32 [#allocation2], 4
      %s24 = int_to_ptr.vmem [resolvable:$true] %s23
      %29 = dma.hbm_to_vmem [thread:$0]  %s2, 8192, %s24, [#allocation3], 512, 512, 32
    $region13: #{tpu_custom_call.1} parent=1 // pred_fallthru
      _
    // Predicated region
    $region14: #{tpu_custom_call.1} parent=1 // pred_check
      _
    $region15: #{tpu_custom_call.1} parent=1 // pred_check_branch
      %31 = sbr.rel (0) target = $region17
    $region16: #{tpu_custom_call.1} parent=1 // pred_region
      _
    $region17: #{tpu_custom_call.1} parent=1 // pred_fallthru
      _
    // Predicated region
    $region18: #{tpu_custom_call.1} parent=1 // pred_check
      _
    $region19: #{tpu_custom_call.1} parent=1 // pred_check_branch
      %33 = sbr.rel (0) target = $region21
    $region20: #{tpu_custom_call.1} parent=1 // pred_region
      %s35 = ssub.s32 2048, 2048
      %36 = vsyncadd [#allocation6], %s35
      %s37 = sshll.u32 [#allocation5], 4
      %s38 = int_to_ptr.vmem [resolvable:$true] %s37
      %43 = dma.hbm_to_vmem [thread:$0]  %s4, 2048, %s38, [#allocation6], 128, 128, 8
    $region21: #{tpu_custom_call.1} parent=1 // pred_fallthru
      _
    // Predicated region
    $region22: #{tpu_custom_call.1} parent=1 // pred_check
      _
    $region23: #{tpu_custom_call.1} parent=1 // pred_check_branch
      %45 = sbr.rel (0) target = $region25
    $region24: #{tpu_custom_call.1} parent=1 // pred_region
      _
    $region25: #{tpu_custom_call.1} parent=1 // pred_fallthru
      _
    // Predicated region
    $region26: #{tpu_custom_call.1} parent=1 // pred_check
      _
    $region27: #{tpu_custom_call.1} parent=1 // pred_check_branch
      %47 = sbr.rel (0) target = $region29
    $region28: #{tpu_custom_call.1} parent=1 // pred_region
      %48 = dma.done [#allocation3], 8192
    $region29: #{tpu_custom_call.1} parent=1 // pred_fallthru
      _
    // Predicated region
    $region30: #{tpu_custom_call.1} parent=1 // pred_check
      _
    $region31: #{tpu_custom_call.1} parent=1 // pred_check_branch
      %50 = sbr.rel (0) target = $region33
    $region32: #{tpu_custom_call.1} parent=1 // pred_region
      %51 = dma.done [#allocation6], 2048
    $region33: #{tpu_custom_call.1} parent=1 // pred_fallthru
      _
    %v52 = vld [vmem:[%s0] sm:$0xff]
    %v53 = vld [vmem:[%s1] sm:$0xf]
    %v54 = vld [vmem:[%s3] sm:$0xf]
    %v56 = vlaneseq
    %v57 = vshrl.u32 %v56, 7
    %v58 = vsub.s32 0, %v57
    %v59 = vrot.slane %v54, %v58
    %v60 = vlaneseq
    %v61 = vshrl.u32 %v60, 7
    %v62 = vsub.s32 1, %v61
    %v63 = vrot.slane %v54, %v62
    %v64 = vlaneseq
    %v65 = vshrl.u32 %v64, 7
    %v66 = vsub.s32 2, %v65
    %v67 = vrot.slane %v54, %v66
    %v68 = vlaneseq
    %v69 = vshrl.u32 %v68, 7
    %v70 = vsub.s32 3, %v69
    %v71 = vrot.slane %v54, %v70
    %v77 = vlaneseq
    %v78 = vshrl.u32 %v77, 7
    %v79 = vsub.s32 0, %v78
    %v80 = vrot.slane %v53, %v79
    %v81 = vlaneseq
    %v82 = vshrl.u32 %v81, 7
    %v83 = vsub.s32 1, %v82
    %v84 = vrot.slane %v53, %v83
    %v85 = vlaneseq
    %v86 = vshrl.u32 %v85, 7
    %v87 = vsub.s32 2, %v86
    %v88 = vrot.slane %v53, %v87
    %v89 = vlaneseq
    %v90 = vshrl.u32 %v89, 7
    %v91 = vsub.s32 3, %v90
    %v92 = vrot.slane %v53, %v91
    %vm93 = vcmask 7168
    %v95 = vsel %vm93, %v52, 0
    %vm97 = vcmask 1040384
    %v98 = vsel %vm97, %v80, 0
    %v100 = vsel %vm97, %v84, 0
    %v102 = vsel %vm97, %v88, 0
    %v104 = vsel %vm97, %v92, 0
    %106 = vmatprep.subr.mxu0 %v100
    %107 = vmatpush1.msra.mxu0 %v98
    %108 = vmatprep.subr.mxu0 0.0
    %109 = vmatpush1.msra.mxu0 0.0
    %110 = vmatprep.subr.mxu0 0.0
    %111 = vmatpush1.msra.mxu0 0.0
    %112 = vmatprep.subr.mxu0 0.0
    %113 = vmatpush1.msra.mxu0 0.0
    %114 = vmatprep.subr.mxu0 0.0
    %115 = vmatpush1.msra.mxu0 0.0
    %116 = vmatprep.subr.mxu0 0.0
    %117 = vmatpush1.msra.mxu0 0.0
    %118 = vmatprep.subr.mxu0 0.0
    %119 = vmatpush1.msra.mxu0 0.0
    %120 = vmatprep.subr.mxu0 0.0
    %121 = vmatpush1.msra.mxu0 0.0
    %122 = vmatprep.subr.mxu0 0.0
    %123 = vmatpush1.msra.mxu0 0.0
    %124 = vmatprep.subr.mxu0 0.0
    %125 = vmatpush1.msra.mxu0 0.0
    %126 = vmatprep.subr.mxu0 0.0
    %127 = vmatpush1.msra.mxu0 0.0
    %128 = vmatprep.subr.mxu0 0.0
    %129 = vmatpush1.msra.mxu0 0.0
    %130 = vmatprep.subr.mxu0 0.0
    %131 = vmatpush1.msra.mxu0 0.0
    %132 = vmatprep.subr.mxu0 0.0
    %133 = vmatpush1.msra.mxu0 0.0
    %134 = vmatprep.subr.mxu0 0.0
    %135 = vmatpush1.msra.mxu0 0.0
    %136 = vmatprep.subr.mxu0 0.0
    %137 = vmatpush1.msra.mxu0 0.0
    %138 = vmatprep.subr.mxu0 0.0
    %139 = vmatpush1.msra.mxu0 0.0
    %140 = vmatprep.subr.mxu0 0.0
    %141 = vmatpush1.msra.mxu0 0.0
    %142 = vmatprep.subr.mxu0 0.0
    %143 = vmatpush1.msra.mxu0 0.0
    %144 = vmatprep.subr.mxu0 0.0
    %145 = vmatpush1.msra.mxu0 0.0
    %146 = vmatprep.subr.mxu0 0.0
    %147 = vmatpush1.msra.mxu0 0.0
    %148 = vmatprep.subr.mxu0 0.0
    %149 = vmatpush1.msra.mxu0 0.0
    %150 = vmatprep.subr.mxu0 0.0
    %151 = vmatpush1.msra.mxu0 0.0
    %152 = vmatprep.subr.mxu0 0.0
    %153 = vmatpush1.msra.mxu0 0.0
    %154 = vmatprep.subr.mxu0 0.0
    %155 = vmatpush1.msra.mxu0 0.0
    %156 = vmatprep.subr.mxu0 0.0
    %157 = vmatpush1.msra.mxu0 0.0
    %158 = vmatprep.subr.mxu0 0.0
    %159 = vmatpush1.msra.mxu0 0.0
    %160 = vmatprep.subr.mxu0 0.0
    %161 = vmatpush1.msra.mxu0 0.0
    %162 = vmatprep.subr.mxu0 0.0
    %163 = vmatpush1.msra.mxu0 0.0
    %164 = vmatprep.subr.mxu0 0.0
    %165 = vmatpush1.msra.mxu0 0.0
    %166 = vmatprep.subr.mxu0 0.0
    %167 = vmatpush1.msra.mxu0 0.0
    %168 = vmatprep.subr.mxu0 0.0
    %169 = vmatpush1.msra.mxu0 0.0
    %170 = vmatprep.mubr.f32.mxu0 0.0
    %171 = vmatmul.mubr.f32.gmra.mrb[0].mxu0 %v95
    %v172 = vpop.f32.mrb[0].mxu0
    %v173 = vadd.f32 %v59, %v172
    %v174 = vpop.f32.mrb[0].mxu0
    %v175 = vadd.f32 %v63, %v174
    %176 = vdwg.mxu0
    %177 = vmatprep.subr.mxu0 %v104
    %178 = vmatpush1.msra.mxu0 %v102
    %179 = vmatprep.subr.mxu0 0.0
    %180 = vmatpush1.msra.mxu0 0.0
    %181 = vmatprep.subr.mxu0 0.0
    %182 = vmatpush1.msra.mxu0 0.0
    %183 = vmatprep.subr.mxu0 0.0
    %184 = vmatpush1.msra.mxu0 0.0
    %185 = vmatprep.subr.mxu0 0.0
    %186 = vmatpush1.msra.mxu0 0.0
    %187 = vmatprep.subr.mxu0 0.0
    %188 = vmatpush1.msra.mxu0 0.0
    %189 = vmatprep.subr.mxu0 0.0
    %190 = vmatpush1.msra.mxu0 0.0
    %191 = vmatprep.subr.mxu0 0.0
    %192 = vmatpush1.msra.mxu0 0.0
    %193 = vmatprep.subr.mxu0 0.0
    %194 = vmatpush1.msra.mxu0 0.0
    %195 = vmatprep.subr.mxu0 0.0
    %196 = vmatpush1.msra.mxu0 0.0
    %197 = vmatprep.subr.mxu0 0.0
    %198 = vmatpush1.msra.mxu0 0.0
    %199 = vmatprep.subr.mxu0 0.0
    %200 = vmatpush1.msra.mxu0 0.0
    %201 = vmatprep.subr.mxu0 0.0
    %202 = vmatpush1.msra.mxu0 0.0
    %203 = vmatprep.subr.mxu0 0.0
    %204 = vmatpush1.msra.mxu0 0.0
    %205 = vmatprep.subr.mxu0 0.0
    %206 = vmatpush1.msra.mxu0 0.0
    %207 = vmatprep.subr.mxu0 0.0
    %208 = vmatpush1.msra.mxu0 0.0
    %209 = vmatprep.subr.mxu0 0.0
    %210 = vmatpush1.msra.mxu0 0.0
    %211 = vmatprep.subr.mxu0 0.0
    %212 = vmatpush1.msra.mxu0 0.0
    %213 = vmatprep.subr.mxu0 0.0
    %214 = vmatpush1.msra.mxu0 0.0
    %215 = vmatprep.subr.mxu0 0.0
    %216 = vmatpush1.msra.mxu0 0.0
    %217 = vmatprep.subr.mxu0 0.0
    %218 = vmatpush1.msra.mxu0 0.0
    %219 = vmatprep.subr.mxu0 0.0
    %220 = vmatpush1.msra.mxu0 0.0
    %221 = vmatprep.subr.mxu0 0.0
    %222 = vmatpush1.msra.mxu0 0.0
    %223 = vmatprep.subr.mxu0 0.0
    %224 = vmatpush1.msra.mxu0 0.0
    %225 = vmatprep.subr.mxu0 0.0
    %226 = vmatpush1.msra.mxu0 0.0
    %227 = vmatprep.subr.mxu0 0.0
    %228 = vmatpush1.msra.mxu0 0.0
    %229 = vmatprep.subr.mxu0 0.0
    %230 = vmatpush1.msra.mxu0 0.0
    %231 = vmatprep.subr.mxu0 0.0
    %232 = vmatpush1.msra.mxu0 0.0
    %233 = vmatprep.subr.mxu0 0.0
    %234 = vmatpush1.msra.mxu0 0.0
    %235 = vmatprep.subr.mxu0 0.0
    %236 = vmatpush1.msra.mxu0 0.0
    %237 = vmatprep.subr.mxu0 0.0
    %238 = vmatpush1.msra.mxu0 0.0
    %239 = vmatprep.subr.mxu0 0.0
    %240 = vmatpush1.msra.mxu0 0.0
    %241 = vmatprep.mubr.f32.mxu0 0.0
    %242 = vmatmul.mubr.f32.gmra.mrb[0].mxu0 %v95
    %v243 = vpop.f32.mrb[0].mxu0
    %v244 = vadd.f32 %v67, %v243
    %v245 = vpop.f32.mrb[0].mxu0
    %v246 = vadd.f32 %v71, %v245
    %247 = vdwg.mxu0
    %v248 = vld [vmem:[#allocation2] sm:$0xff]
    %v249 = vld [vmem:[#allocation2 + $0x8] sm:$0xff]
    %v250 = vld [vmem:[#allocation2 + $0x10] sm:$0xff]
    %v251 = vld [vmem:[#allocation2 + $0x18] sm:$0xff]
    %v252 = vld [vmem:[#allocation2 + $0x20] sm:$0xff]
    %v253 = vld [vmem:[#allocation2 + $0x28] sm:$0xff]
    %v254 = vld [vmem:[#allocation2 + $0x30] sm:$0xff]
    %v255 = vld [vmem:[#allocation2 + $0x38] sm:$0xff]
    %v256 = vld [vmem:[#allocation2 + $0x40] sm:$0xff]
    %v257 = vld [vmem:[#allocation2 + $0x48] sm:$0xff]
    %v258 = vld [vmem:[#allocation2 + $0x50] sm:$0xff]
    %v259 = vld [vmem:[#allocation2 + $0x58] sm:$0xff]
    %v260 = vld [vmem:[#allocation2 + $0x60] sm:$0xff]
    %v261 = vld [vmem:[#allocation2 + $0x68] sm:$0xff]
    %v262 = vld [vmem:[#allocation2 + $0x70] sm:$0xff]
    %v263 = vld [vmem:[#allocation2 + $0x78] sm:$0xff]
    %v264 = vld [vmem:[#allocation2 + $0x80] sm:$0xff]
    %v265 = vld [vmem:[#allocation2 + $0x88] sm:$0xff]
    %v266 = vld [vmem:[#allocation2 + $0x90] sm:$0xff]
    %v267 = vld [vmem:[#allocation2 + $0x98] sm:$0xff]
    %v268 = vld [vmem:[#allocation2 + $0xa0] sm:$0xff]
    %v269 = vld [vmem:[#allocation2 + $0xa8] sm:$0xff]
    %v270 = vld [vmem:[#allocation2 + $0xb0] sm:$0xff]
    %v271 = vld [vmem:[#allocation2 + $0xb8] sm:$0xff]
    %v272 = vld [vmem:[#allocation2 + $0xc0] sm:$0xff]
    %v273 = vld [vmem:[#allocation2 + $0xc8] sm:$0xff]
    %v274 = vld [vmem:[#allocation2 + $0xd0] sm:$0xff]
    %v275 = vld [vmem:[#allocation2 + $0xd8] sm:$0xff]
    %v276 = vld [vmem:[#allocation2 + $0xe0] sm:$0xff]
    %v277 = vld [vmem:[#allocation2 + $0xe8] sm:$0xff]
    %v278 = vld [vmem:[#allocation2 + $0xf0] sm:$0xff]
    %v279 = vld [vmem:[#allocation2 + $0xf8] sm:$0xff]
    %v280 = vld [vmem:[#allocation2 + $0x100] sm:$0xff]
    %v281 = vld [vmem:[#allocation2 + $0x108] sm:$0xff]
    %v282 = vld [vmem:[#allocation2 + $0x110] sm:$0xff]
    %v283 = vld [vmem:[#allocation2 + $0x118] sm:$0xff]
    %v284 = vld [vmem:[#allocation2 + $0x120] sm:$0xff]
    %v285 = vld [vmem:[#allocation2 + $0x128] sm:$0xff]
    %v286 = vld [vmem:[#allocation2 + $0x130] sm:$0xff]
    %v287 = vld [vmem:[#allocation2 + $0x138] sm:$0xff]
    %v288 = vld [vmem:[#allocation2 + $0x140] sm:$0xff]
    %v289 = vld [vmem:[#allocation2 + $0x148] sm:$0xff]
    %v290 = vld [vmem:[#allocation2 + $0x150] sm:$0xff]
    %v291 = vld [vmem:[#allocation2 + $0x158] sm:$0xff]
    %v292 = vld [vmem:[#allocation2 + $0x160] sm:$0xff]
    %v293 = vld [vmem:[#allocation2 + $0x168] sm:$0xff]
    %v294 = vld [vmem:[#allocation2 + $0x170] sm:$0xff]
    %v295 = vld [vmem:[#allocation2 + $0x178] sm:$0xff]
    %v296 = vld [vmem:[#allocation2 + $0x180] sm:$0xff]
    %v297 = vld [vmem:[#allocation2 + $0x188] sm:$0xff]
    %v298 = vld [vmem:[#allocation2 + $0x190] sm:$0xff]
    %v299 = vld [vmem:[#allocation2 + $0x198] sm:$0xff]
    %v300 = vld [vmem:[#allocation2 + $0x1a0] sm:$0xff]
    %v301 = vld [vmem:[#allocation2 + $0x1a8] sm:$0xff]
    %v302 = vld [vmem:[#allocation2 + $0x1b0] sm:$0xff]
    %v303 = vld [vmem:[#allocation2 + $0x1b8] sm:$0xff]
    %v304 = vld [vmem:[#allocation2 + $0x1c0] sm:$0xff]
    %v305 = vld [vmem:[#allocation2 + $0x1c8] sm:$0xff]
    %v306 = vld [vmem:[#allocation2 + $0x1d0] sm:$0xff]
    %v307 = vld [vmem:[#allocation2 + $0x1d8] sm:$0xff]
    %v308 = vld [vmem:[#allocation2 + $0x1e0] sm:$0xff]
    %v309 = vld [vmem:[#allocation2 + $0x1e8] sm:$0xff]
    %v310 = vld [vmem:[#allocation2 + $0x1f0] sm:$0xff]
    %v311 = vld [vmem:[#allocation2 + $0x1f8] sm:$0xff]
    %312 = vmatprep.subr.mxu0 %v249
    %313 = vmatpush1.msra.mxu0 %v248
    %314 = vmatprep.subr.mxu0 %v253
    %315 = vmatpush1.msra.mxu0 %v252
    %316 = vmatprep.subr.mxu0 %v257
    %317 = vmatpush1.msra.mxu0 %v256
    %318 = vmatprep.subr.mxu0 %v261
    %319 = vmatpush1.msra.mxu0 %v260
    %320 = vmatprep.subr.mxu0 %v265
    %321 = vmatpush1.msra.mxu0 %v264
    %322 = vmatprep.subr.mxu0 %v269
    %323 = vmatpush1.msra.mxu0 %v268
    %324 = vmatprep.subr.mxu0 %v273
    %325 = vmatpush1.msra.mxu0 %v272
    %326 = vmatprep.subr.mxu0 %v277
    %327 = vmatpush1.msra.mxu0 %v276
    %328 = vmatprep.subr.mxu0 %v281
    %329 = vmatpush1.msra.mxu0 %v280
    %330 = vmatprep.subr.mxu0 %v285
    %331 = vmatpush1.msra.mxu0 %v284
    %332 = vmatprep.subr.mxu0 %v289
    %333 = vmatpush1.msra.mxu0 %v288
    %334 = vmatprep.subr.mxu0 %v293
    %335 = vmatpush1.msra.mxu0 %v292
    %336 = vmatprep.subr.mxu0 %v297
    %337 = vmatpush1.msra.mxu0 %v296
    %338 = vmatprep.subr.mxu0 %v301
    %339 = vmatpush1.msra.mxu0 %v300
    %340 = vmatprep.subr.mxu0 %v305
    %341 = vmatpush1.msra.mxu0 %v304
    %342 = vmatprep.subr.mxu0 %v309
    %343 = vmatpush1.msra.mxu0 %v308
    %344 = vmatprep.subr.mxu0 0.0
    %345 = vmatpush1.msra.mxu0 0.0
    %346 = vmatprep.subr.mxu0 0.0
    %347 = vmatpush1.msra.mxu0 0.0
    %348 = vmatprep.subr.mxu0 0.0
    %349 = vmatpush1.msra.mxu0 0.0
    %350 = vmatprep.subr.mxu0 0.0
    %351 = vmatpush1.msra.mxu0 0.0
    %352 = vmatprep.subr.mxu0 0.0
    %353 = vmatpush1.msra.mxu0 0.0
    %354 = vmatprep.subr.mxu0 0.0
    %355 = vmatpush1.msra.mxu0 0.0
    %356 = vmatprep.subr.mxu0 0.0
    %357 = vmatpush1.msra.mxu0 0.0
    %358 = vmatprep.subr.mxu0 0.0
    %359 = vmatpush1.msra.mxu0 0.0
    %360 = vmatprep.subr.mxu0 0.0
    %361 = vmatpush1.msra.mxu0 0.0
    %362 = vmatprep.subr.mxu0 0.0
    %363 = vmatpush1.msra.mxu0 0.0
    %364 = vmatprep.subr.mxu0 0.0
    %365 = vmatpush1.msra.mxu0 0.0
    %366 = vmatprep.subr.mxu0 0.0
    %367 = vmatpush1.msra.mxu0 0.0
    %368 = vmatprep.subr.mxu0 0.0
    %369 = vmatpush1.msra.mxu0 0.0
    %370 = vmatprep.subr.mxu0 0.0
    %371 = vmatpush1.msra.mxu0 0.0
    %372 = vmatprep.subr.mxu0 0.0
    %373 = vmatpush1.msra.mxu0 0.0
    %374 = vmatprep.subr.mxu0 0.0
    %375 = vmatpush1.msra.mxu0 0.0
    %376 = vmatprep.mubr.f32.mxu0 0.0
    %377 = vmatmul.mubr.f32.gmra.mrb[0].mxu0 0.0
    %v378 = vpop.f32.mrb[0].mxu0
    %v379 = vadd.f32 0.0, %v378
    %v380 = vpop.f32.mrb[0].mxu0
    %v381 = vadd.f32 0.0, %v380
    %382 = vdwg.mxu0
    %383 = vmatprep.subr.mxu0 %v251
    %384 = vmatpush1.msra.mxu0 %v250
    %385 = vmatprep.subr.mxu0 %v255
    %386 = vmatpush1.msra.mxu0 %v254
    %387 = vmatprep.subr.mxu0 %v259
    %388 = vmatpush1.msra.mxu0 %v258
    %389 = vmatprep.subr.mxu0 %v263
    %390 = vmatpush1.msra.mxu0 %v262
    %391 = vmatprep.subr.mxu0 %v267
    %392 = vmatpush1.msra.mxu0 %v266
    %393 = vmatprep.subr.mxu0 %v271
    %394 = vmatpush1.msra.mxu0 %v270
    %395 = vmatprep.subr.mxu0 %v275
    %396 = vmatpush1.msra.mxu0 %v274
    %397 = vmatprep.subr.mxu0 %v279
    %398 = vmatpush1.msra.mxu0 %v278
    %399 = vmatprep.subr.mxu0 %v283
    %400 = vmatpush1.msra.mxu0 %v282
    %401 = vmatprep.subr.mxu0 %v287
    %402 = vmatpush1.msra.mxu0 %v286
    %403 = vmatprep.subr.mxu0 %v291
    %404 = vmatpush1.msra.mxu0 %v290
    %405 = vmatprep.subr.mxu0 %v295
    %406 = vmatpush1.msra.mxu0 %v294
    %407 = vmatprep.subr.mxu0 %v299
    %408 = vmatpush1.msra.mxu0 %v298
    %409 = vmatprep.subr.mxu0 %v303
    %410 = vmatpush1.msra.mxu0 %v302
    %411 = vmatprep.subr.mxu0 %v307
    %412 = vmatpush1.msra.mxu0 %v306
    %413 = vmatprep.subr.mxu0 %v311
    %414 = vmatpush1.msra.mxu0 %v310
    %415 = vmatprep.subr.mxu0 0.0
    %416 = vmatpush1.msra.mxu0 0.0
    %417 = vmatprep.subr.mxu0 0.0
    %418 = vmatpush1.msra.mxu0 0.0
    %419 = vmatprep.subr.mxu0 0.0
    %420 = vmatpush1.msra.mxu0 0.0
    %421 = vmatprep.subr.mxu0 0.0
    %422 = vmatpush1.msra.mxu0 0.0
    %423 = vmatprep.subr.mxu0 0.0
    %424 = vmatpush1.msra.mxu0 0.0
    %425 = vmatprep.subr.mxu0 0.0
    %426 = vmatpush1.msra.mxu0 0.0
    %427 = vmatprep.subr.mxu0 0.0
    %428 = vmatpush1.msra.mxu0 0.0
    %429 = vmatprep.subr.mxu0 0.0
    %430 = vmatpush1.msra.mxu0 0.0
    %431 = vmatprep.subr.mxu0 0.0
    %432 = vmatpush1.msra.mxu0 0.0
    %433 = vmatprep.subr.mxu0 0.0
    %434 = vmatpush1.msra.mxu0 0.0
    %435 = vmatprep.subr.mxu0 0.0
    %436 = vmatpush1.msra.mxu0 0.0
    %437 = vmatprep.subr.mxu0 0.0
    %438 = vmatpush1.msra.mxu0 0.0
    %439 = vmatprep.subr.mxu0 0.0
    %440 = vmatpush1.msra.mxu0 0.0
    %441 = vmatprep.subr.mxu0 0.0
    %442 = vmatpush1.msra.mxu0 0.0
    %443 = vmatprep.subr.mxu0 0.0
    %444 = vmatpush1.msra.mxu0 0.0
    %445 = vmatprep.subr.mxu0 0.0
    %446 = vmatpush1.msra.mxu0 0.0
    %447 = vmatprep.mubr.f32.mxu0 0.0
    %448 = vmatmul.mubr.f32.gmra.mrb[0].mxu0 0.0
    %v449 = vpop.f32.mrb[0].mxu0
    %v450 = vadd.f32 0.0, %v449
    %v451 = vpop.f32.mrb[0].mxu0
    %v452 = vadd.f32 0.0, %v451
    %453 = vdwg.mxu0
    %v454 = vadd.f32 %v173, %v379
    %v455 = vadd.f32 %v175, %v381
    %v456 = vadd.f32 %v244, %v450
    %v457 = vadd.f32 %v246, %v452
    %v458 = vxor.u32 %v454, 2147483648
    %v459 = vxor.u32 %v455, 2147483648
    %v460 = vxor.u32 %v456, 2147483648
    %v461 = vmul.f32 %v458, 1.442695
    %v462 = vpow.pop %v461
    %v463 = vmul.f32 %v459, 1.442695
    %v464 = vpow.pop %v463
    %v465 = vmul.f32 %v460, 1.442695
    %v466 = vpow.pop %v465
    %v467 = vadd.f32 %v462, 1.0
    %v468 = vadd.f32 %v464, 1.0
    %v469 = vadd.f32 %v466, 1.0
    %v470 = vrcp.pop %v467
    %v471 = vmul.f32 1.0, %v470
    %v472 = vrcp.pop %v468
    %v473 = vmul.f32 1.0, %v472
    %v474 = vrcp.pop %v469
    %v475 = vmul.f32 1.0, %v474
    %v476 = vtanh.pop %v457
    %v477 = vmul.f32 %v473, 0.0
    %v478 = vmul.f32 %v471, %v476
    %v479 = vadd.f32 %v477, %v478
    %v480 = vtanh.pop %v479
    %v481 = vmul.f32 %v475, %v480
    %482 = vmatprep.subr.mxu0 %v249
    %483 = vmatpush1.msra.mxu0 %v248
    %484 = vmatprep.subr.mxu0 %v253
    %485 = vmatpush1.msra.mxu0 %v252
    %486 = vmatprep.subr.mxu0 %v257
    %487 = vmatpush1.msra.mxu0 %v256
    %488 = vmatprep.subr.mxu0 %v261
    %489 = vmatpush1.msra.mxu0 %v260
    %490 = vmatprep.subr.mxu0 %v265
    %491 = vmatpush1.msra.mxu0 %v264
    %492 = vmatprep.subr.mxu0 %v269
    %493 = vmatpush1.msra.mxu0 %v268
    %494 = vmatprep.subr.mxu0 %v273
    %495 = vmatpush1.msra.mxu0 %v272
    %496 = vmatprep.subr.mxu0 %v277
    %497 = vmatpush1.msra.mxu0 %v276
    %498 = vmatprep.subr.mxu0 %v281
    %499 = vmatpush1.msra.mxu0 %v280
    %500 = vmatprep.subr.mxu0 %v285
    %501 = vmatpush1.msra.mxu0 %v284
    %502 = vmatprep.subr.mxu0 %v289
    %503 = vmatpush1.msra.mxu0 %v288
    %504 = vmatprep.subr.mxu0 %v293
    %505 = vmatpush1.msra.mxu0 %v292
    %506 = vmatprep.subr.mxu0 %v297
    %507 = vmatpush1.msra.mxu0 %v296
    %508 = vmatprep.subr.mxu0 %v301
    %509 = vmatpush1.msra.mxu0 %v300
    %510 = vmatprep.subr.mxu0 %v305
    %511 = vmatpush1.msra.mxu0 %v304
    %512 = vmatprep.subr.mxu0 %v309
    %513 = vmatpush1.msra.mxu0 %v308
    %514 = vmatprep.subr.mxu0 0.0
    %515 = vmatpush1.msra.mxu0 0.0
    %516 = vmatprep.subr.mxu0 0.0
    %517 = vmatpush1.msra.mxu0 0.0
    %518 = vmatprep.subr.mxu0 0.0
    %519 = vmatpush1.msra.mxu0 0.0
    %520 = vmatprep.subr.mxu0 0.0
    %521 = vmatpush1.msra.mxu0 0.0
    %522 = vmatprep.subr.mxu0 0.0
    %523 = vmatpush1.msra.mxu0 0.0
    %524 = vmatprep.subr.mxu0 0.0
    %525 = vmatpush1.msra.mxu0 0.0
    %526 = vmatprep.subr.mxu0 0.0
    %527 = vmatpush1.msra.mxu0 0.0
    %528 = vmatprep.subr.mxu0 0.0
    %529 = vmatpush1.msra.mxu0 0.0
    %530 = vmatprep.subr.mxu0 0.0
    %531 = vmatpush1.msra.mxu0 0.0
    %532 = vmatprep.subr.mxu0 0.0
    %533 = vmatpush1.msra.mxu0 0.0
    %534 = vmatprep.subr.mxu0 0.0
    %535 = vmatpush1.msra.mxu0 0.0
    %536 = vmatprep.subr.mxu0 0.0
    %537 = vmatpush1.msra.mxu0 0.0
    %538 = vmatprep.subr.mxu0 0.0
    %539 = vmatpush1.msra.mxu0 0.0
    %540 = vmatprep.subr.mxu0 0.0
    %541 = vmatpush1.msra.mxu0 0.0
    %542 = vmatprep.subr.mxu0 0.0
    %543 = vmatpush1.msra.mxu0 0.0
    %544 = vmatprep.subr.mxu0 0.0
    %545 = vmatpush1.msra.mxu0 0.0
    %546 = vmatprep.mubr.f32.mxu0 0.0
    %547 = vmatmul.mubr.f32.gmra.mrb[0].mxu0 %v481
    %v548 = vpop.f32.mrb[0].mxu0
    %v549 = vadd.f32 0.0, %v548
    %v550 = vpop.f32.mrb[0].mxu0
    %v551 = vadd.f32 0.0, %v550
    %552 = vdwg.mxu0
    %553 = vmatprep.subr.mxu0 %v251
    %554 = vmatpush1.msra.mxu0 %v250
    %555 = vmatprep.subr.mxu0 %v255
    %556 = vmatpush1.msra.mxu0 %v254
    %557 = vmatprep.subr.mxu0 %v259
    %558 = vmatpush1.msra.mxu0 %v258
    %559 = vmatprep.subr.mxu0 %v263
    %560 = vmatpush1.msra.mxu0 %v262
    %561 = vmatprep.subr.mxu0 %v267
    %562 = vmatpush1.msra.mxu0 %v266
    %563 = vmatprep.subr.mxu0 %v271
    %564 = vmatpush1.msra.mxu0 %v270
    %565 = vmatprep.subr.mxu0 %v275
    %566 = vmatpush1.msra.mxu0 %v274
    %567 = vmatprep.subr.mxu0 %v279
    %568 = vmatpush1.msra.mxu0 %v278
    %569 = vmatprep.subr.mxu0 %v283
    %570 = vmatpush1.msra.mxu0 %v282
    %571 = vmatprep.subr.mxu0 %v287
    %572 = vmatpush1.msra.mxu0 %v286
    %573 = vmatprep.subr.mxu0 %v291
    %574 = vmatpush1.msra.mxu0 %v290
    %575 = vmatprep.subr.mxu0 %v295
    %576 = vmatpush1.msra.mxu0 %v294
    %577 = vmatprep.subr.mxu0 %v299
    %578 = vmatpush1.msra.mxu0 %v298
    %579 = vmatprep.subr.mxu0 %v303
    %580 = vmatpush1.msra.mxu0 %v302
    %581 = vmatprep.subr.mxu0 %v307
    %582 = vmatpush1.msra.mxu0 %v306
    %583 = vmatprep.subr.mxu0 %v311
    %584 = vmatpush1.msra.mxu0 %v310
    %585 = vmatprep.subr.mxu0 0.0
    %586 = vmatpush1.msra.mxu0 0.0
    %587 = vmatprep.subr.mxu0 0.0
    %588 = vmatpush1.msra.mxu0 0.0
    %589 = vmatprep.subr.mxu0 0.0
    %590 = vmatpush1.msra.mxu0 0.0
    %591 = vmatprep.subr.mxu0 0.0
    %592 = vmatpush1.msra.mxu0 0.0
    %593 = vmatprep.subr.mxu0 0.0
    %594 = vmatpush1.msra.mxu0 0.0
    %595 = vmatprep.subr.mxu0 0.0
    %596 = vmatpush1.msra.mxu0 0.0
    %597 = vmatprep.subr.mxu0 0.0
    %598 = vmatpush1.msra.mxu0 0.0
    %599 = vmatprep.subr.mxu0 0.0
    %600 = vmatpush1.msra.mxu0 0.0
    %601 = vmatprep.subr.mxu0 0.0
    %602 = vmatpush1.msra.mxu0 0.0
    %603 = vmatprep.subr.mxu0 0.0
    %604 = vmatpush1.msra.mxu0 0.0
    %605 = vmatprep.subr.mxu0 0.0
    %606 = vmatpush1.msra.mxu0 0.0
    %607 = vmatprep.subr.mxu0 0.0
    %608 = vmatpush1.msra.mxu0 0.0
    %609 = vmatprep.subr.mxu0 0.0
    %610 = vmatpush1.msra.mxu0 0.0
    %611 = vmatprep.subr.mxu0 0.0
    %612 = vmatpush1.msra.mxu0 0.0
    %613 = vmatprep.subr.mxu0 0.0
    %614 = vmatpush1.msra.mxu0 0.0
    %615 = vmatprep.subr.mxu0 0.0
    %616 = vmatpush1.msra.mxu0 0.0
    %617 = vmatprep.mubr.f32.mxu0 0.0
    %618 = vmatmul.mubr.f32.gmra.mrb[0].mxu0 %v481
    %v619 = vpop.f32.mrb[0].mxu0
    %v620 = vadd.f32 0.0, %v619
    %v621 = vpop.f32.mrb[0].mxu0
    %v622 = vadd.f32 0.0, %v621
    %623 = vdwg.mxu0
    %v628 = vrot.slane %v549, 7
    %v629 = vrot.slane %v551, 7
    %v630 = vrot.slane %v620, 7
    %v631 = vrot.slane %v622, 7
    %v636 = vadd.f32 %v173, %v628
    %v637 = vadd.f32 %v175, %v629
    %v638 = vadd.f32 %v244, %v630
    %v639 = vadd.f32 %v246, %v631
    %v640 = vxor.u32 %v636, 2147483648
    %v641 = vxor.u32 %v637, 2147483648
    %v642 = vxor.u32 %v638, 2147483648
    %v643 = vmul.f32 %v640, 1.442695
    %v644 = vpow.pop %v643
    %v645 = vmul.f32 %v641, 1.442695
    %v646 = vpow.pop %v645
    %v647 = vmul.f32 %v642, 1.442695
    %v648 = vpow.pop %v647
    %v649 = vadd.f32 %v644, 1.0
    %v650 = vadd.f32 %v646, 1.0
    %v651 = vadd.f32 %v648, 1.0
    %v652 = vrcp.pop %v649
    %v653 = vmul.f32 1.0, %v652
    %v654 = vrcp.pop %v650
    %v655 = vmul.f32 1.0, %v654
    %v656 = vrcp.pop %v651
    %v657 = vmul.f32 1.0, %v656
    %v658 = vtanh.pop %v639
    %v660 = vrot.slane %v479, 7
    %v662 = vmul.f32 %v655, %v660
    %v663 = vmul.f32 %v653, %v658
    %v664 = vadd.f32 %v662, %v663
    %v665 = vtanh.pop %v664
    %v666 = vmul.f32 %v657, %v665
    %v668 = vrot.slane %v666, 1
    %670 = vmatprep.subr.mxu0 %v249
    %671 = vmatpush1.msra.mxu0 %v248
    %672 = vmatprep.subr.mxu0 %v253
    %673 = vmatpush1.msra.mxu0 %v252
    %674 = vmatprep.subr.mxu0 %v257
    %675 = vmatpush1.msra.mxu0 %v256
    %676 = vmatprep.subr.mxu0 %v261
    %677 = vmatpush1.msra.mxu0 %v260
    %678 = vmatprep.subr.mxu0 %v265
    %679 = vmatpush1.msra.mxu0 %v264
    %680 = vmatprep.subr.mxu0 %v269
    %681 = vmatpush1.msra.mxu0 %v268
    %682 = vmatprep.subr.mxu0 %v273
    %683 = vmatpush1.msra.mxu0 %v272
    %684 = vmatprep.subr.mxu0 %v277
    %685 = vmatpush1.msra.mxu0 %v276
    %686 = vmatprep.subr.mxu0 %v281
    %687 = vmatpush1.msra.mxu0 %v280
    %688 = vmatprep.subr.mxu0 %v285
    %689 = vmatpush1.msra.mxu0 %v284
    %690 = vmatprep.subr.mxu0 %v289
    %691 = vmatpush1.msra.mxu0 %v288
    %692 = vmatprep.subr.mxu0 %v293
    %693 = vmatpush1.msra.mxu0 %v292
    %694 = vmatprep.subr.mxu0 %v297
    %695 = vmatpush1.msra.mxu0 %v296
    %696 = vmatprep.subr.mxu0 %v301
    %697 = vmatpush1.msra.mxu0 %v300
    %698 = vmatprep.subr.mxu0 %v305
    %699 = vmatpush1.msra.mxu0 %v304
    %700 = vmatprep.subr.mxu0 %v309
    %701 = vmatpush1.msra.mxu0 %v308
    %702 = vmatprep.subr.mxu0 0.0
    %703 = vmatpush1.msra.mxu0 0.0
    %704 = vmatprep.subr.mxu0 0.0
    %705 = vmatpush1.msra.mxu0 0.0
    %706 = vmatprep.subr.mxu0 0.0
    %707 = vmatpush1.msra.mxu0 0.0
    %708 = vmatprep.subr.mxu0 0.0
    %709 = vmatpush1.msra.mxu0 0.0
    %710 = vmatprep.subr.mxu0 0.0
    %711 = vmatpush1.msra.mxu0 0.0
    %712 = vmatprep.subr.mxu0 0.0
    %713 = vmatpush1.msra.mxu0 0.0
    %714 = vmatprep.subr.mxu0 0.0
    %715 = vmatpush1.msra.mxu0 0.0
    %716 = vmatprep.subr.mxu0 0.0
    %717 = vmatpush1.msra.mxu0 0.0
    %718 = vmatprep.subr.mxu0 0.0
    %719 = vmatpush1.msra.mxu0 0.0
    %720 = vmatprep.subr.mxu0 0.0
    %721 = vmatpush1.msra.mxu0 0.0
    %722 = vmatprep.subr.mxu0 0.0
    %723 = vmatpush1.msra.mxu0 0.0
    %724 = vmatprep.subr.mxu0 0.0
    %725 = vmatpush1.msra.mxu0 0.0
    %726 = vmatprep.subr.mxu0 0.0
    %727 = vmatpush1.msra.mxu0 0.0
    %728 = vmatprep.subr.mxu0 0.0
    %729 = vmatpush1.msra.mxu0 0.0
    %730 = vmatprep.subr.mxu0 0.0
    %731 = vmatpush1.msra.mxu0 0.0
    %732 = vmatprep.subr.mxu0 0.0
    %733 = vmatpush1.msra.mxu0 0.0
    %734 = vmatprep.mubr.f32.mxu0 0.0
    %735 = vmatmul.mubr.f32.gmra.mrb[0].mxu0 %v668
    %v736 = vpop.f32.mrb[0].mxu0
    %v737 = vadd.f32 0.0, %v736
    %v738 = vpop.f32.mrb[0].mxu0
    %v739 = vadd.f32 0.0, %v738
    %740 = vdwg.mxu0
    %741 = vmatprep.subr.mxu0 %v251
    %742 = vmatpush1.msra.mxu0 %v250
    %743 = vmatprep.subr.mxu0 %v255
    %744 = vmatpush1.msra.mxu0 %v254
    %745 = vmatprep.subr.mxu0 %v259
    %746 = vmatpush1.msra.mxu0 %v258
    %747 = vmatprep.subr.mxu0 %v263
    %748 = vmatpush1.msra.mxu0 %v262
    %749 = vmatprep.subr.mxu0 %v267
    %750 = vmatpush1.msra.mxu0 %v266
    %751 = vmatprep.subr.mxu0 %v271
    %752 = vmatpush1.msra.mxu0 %v270
    %753 = vmatprep.subr.mxu0 %v275
    %754 = vmatpush1.msra.mxu0 %v274
    %755 = vmatprep.subr.mxu0 %v279
    %756 = vmatpush1.msra.mxu0 %v278
    %757 = vmatprep.subr.mxu0 %v283
    %758 = vmatpush1.msra.mxu0 %v282
    %759 = vmatprep.subr.mxu0 %v287
    %760 = vmatpush1.msra.mxu0 %v286
    %761 = vmatprep.subr.mxu0 %v291
    %762 = vmatpush1.msra.mxu0 %v290
    %763 = vmatprep.subr.mxu0 %v295
    %764 = vmatpush1.msra.mxu0 %v294
    %765 = vmatprep.subr.mxu0 %v299
    %766 = vmatpush1.msra.mxu0 %v298
    %767 = vmatprep.subr.mxu0 %v303
    %768 = vmatpush1.msra.mxu0 %v302
    %769 = vmatprep.subr.mxu0 %v307
    %770 = vmatpush1.msra.mxu0 %v306
    %771 = vmatprep.subr.mxu0 %v311
    %772 = vmatpush1.msra.mxu0 %v310
    %773 = vmatprep.subr.mxu0 0.0
    %774 = vmatpush1.msra.mxu0 0.0
    %775 = vmatprep.subr.mxu0 0.0
    %776 = vmatpush1.msra.mxu0 0.0
    %777 = vmatprep.subr.mxu0 0.0
    %778 = vmatpush1.msra.mxu0 0.0
    %779 = vmatprep.subr.mxu0 0.0
    %780 = vmatpush1.msra.mxu0 0.0
    %781 = vmatprep.subr.mxu0 0.0
    %782 = vmatpush1.msra.mxu0 0.0
    %783 = vmatprep.subr.mxu0 0.0
    %784 = vmatpush1.msra.mxu0 0.0
    %785 = vmatprep.subr.mxu0 0.0
    %786 = vmatpush1.msra.mxu0 0.0
    %787 = vmatprep.subr.mxu0 0.0
    %788 = vmatpush1.msra.mxu0 0.0
    %789 = vmatprep.subr.mxu0 0.0
    %790 = vmatpush1.msra.mxu0 0.0
    %791 = vmatprep.subr.mxu0 0.0
    %792 = vmatpush1.msra.mxu0 0.0
    %793 = vmatprep.subr.mxu0 0.0
    %794 = vmatpush1.msra.mxu0 0.0
    %795 = vmatprep.subr.mxu0 0.0
    %796 = vmatpush1.msra.mxu0 0.0
    %797 = vmatprep.subr.mxu0 0.0
    %798 = vmatpush1.msra.mxu0 0.0
    %799 = vmatprep.subr.mxu0 0.0
    %800 = vmatpush1.msra.mxu0 0.0
    %801 = vmatprep.subr.mxu0 0.0
    %802 = vmatpush1.msra.mxu0 0.0
    %803 = vmatprep.subr.mxu0 0.0
    %804 = vmatpush1.msra.mxu0 0.0
    %805 = vmatprep.mubr.f32.mxu0 0.0
    %806 = vmatmul.mubr.f32.gmra.mrb[0].mxu0 %v668
    %v807 = vpop.f32.mrb[0].mxu0
    %v808 = vadd.f32 0.0, %v807
    %v809 = vpop.f32.mrb[0].mxu0
    %v810 = vadd.f32 0.0, %v809
    %811 = vdwg.mxu0
    %v816 = vrot.slane %v737, 6
    %v817 = vrot.slane %v739, 6
    %v818 = vrot.slane %v808, 6
    %v819 = vrot.slane %v810, 6
    %v824 = vadd.f32 %v173, %v816
    %v825 = vadd.f32 %v175, %v817
    %v826 = vadd.f32 %v244, %v818
    %v827 = vadd.f32 %v246, %v819
    %v828 = vxor.u32 %v824, 2147483648
    %v829 = vxor.u32 %v825, 2147483648
    %v830 = vxor.u32 %v826, 2147483648
    %v831 = vmul.f32 %v828, 1.442695
    %v832 = vpow.pop %v831
    %v833 = vmul.f32 %v829, 1.442695
    %v834 = vpow.pop %v833
    %v835 = vmul.f32 %v830, 1.442695
    %v836 = vpow.pop %v835
    %v837 = vadd.f32 %v832, 1.0
    %v838 = vadd.f32 %v834, 1.0
    %v839 = vadd.f32 %v836, 1.0
    %v840 = vrcp.pop %v837
    %v841 = vmul.f32 1.0, %v840
    %v842 = vrcp.pop %v838
    %v843 = vmul.f32 1.0, %v842
    %v844 = vrcp.pop %v839
    %v845 = vmul.f32 1.0, %v844
    %v846 = vtanh.pop %v827
    %v848 = vrot.slane %v664, 7
    %v850 = vmul.f32 %v843, %v848
    %v851 = vmul.f32 %v841, %v846
    %v852 = vadd.f32 %v850, %v851
    %v853 = vtanh.pop %v852
    %v854 = vmul.f32 %v845, %v853
    %v856 = vrot.slane %v854, 2
    %858 = vmatprep.subr.mxu0 %v249
    %859 = vmatpush1.msra.mxu0 %v248
    %860 = vmatprep.subr.mxu0 %v253
    %861 = vmatpush1.msra.mxu0 %v252
    %862 = vmatprep.subr.mxu0 %v257
    %863 = vmatpush1.msra.mxu0 %v256
    %864 = vmatprep.subr.mxu0 %v261
    %865 = vmatpush1.msra.mxu0 %v260
    %866 = vmatprep.subr.mxu0 %v265
    %867 = vmatpush1.msra.mxu0 %v264
    %868 = vmatprep.subr.mxu0 %v269
    %869 = vmatpush1.msra.mxu0 %v268
    %870 = vmatprep.subr.mxu0 %v273
    %871 = vmatpush1.msra.mxu0 %v272
    %872 = vmatprep.subr.mxu0 %v277
    %873 = vmatpush1.msra.mxu0 %v276
    %874 = vmatprep.subr.mxu0 %v281
    %875 = vmatpush1.msra.mxu0 %v280
    %876 = vmatprep.subr.mxu0 %v285
    %877 = vmatpush1.msra.mxu0 %v284
    %878 = vmatprep.subr.mxu0 %v289
    %879 = vmatpush1.msra.mxu0 %v288
    %880 = vmatprep.subr.mxu0 %v293
    %881 = vmatpush1.msra.mxu0 %v292
    %882 = vmatprep.subr.mxu0 %v297
    %883 = vmatpush1.msra.mxu0 %v296
    %884 = vmatprep.subr.mxu0 %v301
    %885 = vmatpush1.msra.mxu0 %v300
    %886 = vmatprep.subr.mxu0 %v305
    %887 = vmatpush1.msra.mxu0 %v304
    %888 = vmatprep.subr.mxu0 %v309
    %889 = vmatpush1.msra.mxu0 %v308
    %890 = vmatprep.subr.mxu0 0.0
    %891 = vmatpush1.msra.mxu0 0.0
    %892 = vmatprep.subr.mxu0 0.0
    %893 = vmatpush1.msra.mxu0 0.0
    %894 = vmatprep.subr.mxu0 0.0
    %895 = vmatpush1.msra.mxu0 0.0
    %896 = vmatprep.subr.mxu0 0.0
    %897 = vmatpush1.msra.mxu0 0.0
    %898 = vmatprep.subr.mxu0 0.0
    %899 = vmatpush1.msra.mxu0 0.0
    %900 = vmatprep.subr.mxu0 0.0
    %901 = vmatpush1.msra.mxu0 0.0
    %902 = vmatprep.subr.mxu0 0.0
    %903 = vmatpush1.msra.mxu0 0.0
    %904 = vmatprep.subr.mxu0 0.0
    %905 = vmatpush1.msra.mxu0 0.0
    %906 = vmatprep.subr.mxu0 0.0
    %907 = vmatpush1.msra.mxu0 0.0
    %908 = vmatprep.subr.mxu0 0.0
    %909 = vmatpush1.msra.mxu0 0.0
    %910 = vmatprep.subr.mxu0 0.0
    %911 = vmatpush1.msra.mxu0 0.0
    %912 = vmatprep.subr.mxu0 0.0
    %913 = vmatpush1.msra.mxu0 0.0
    %914 = vmatprep.subr.mxu0 0.0
    %915 = vmatpush1.msra.mxu0 0.0
    %916 = vmatprep.subr.mxu0 0.0
    %917 = vmatpush1.msra.mxu0 0.0
    %918 = vmatprep.subr.mxu0 0.0
    %919 = vmatpush1.msra.mxu0 0.0
    %920 = vmatprep.subr.mxu0 0.0
    %921 = vmatpush1.msra.mxu0 0.0
    %922 = vmatprep.mubr.f32.mxu0 0.0
    %923 = vmatmul.mubr.f32.gmra.mrb[0].mxu0 %v856
    %v924 = vpop.f32.mrb[0].mxu0
    %v925 = vadd.f32 0.0, %v924
    %v926 = vpop.f32.mrb[0].mxu0
    %v927 = vadd.f32 0.0, %v926
    %928 = vdwg.mxu0
    %929 = vmatprep.subr.mxu0 %v251
    %930 = vmatpush1.msra.mxu0 %v250
    %931 = vmatprep.subr.mxu0 %v255
    %932 = vmatpush1.msra.mxu0 %v254
    %933 = vmatprep.subr.mxu0 %v259
    %934 = vmatpush1.msra.mxu0 %v258
    %935 = vmatprep.subr.mxu0 %v263
    %936 = vmatpush1.msra.mxu0 %v262
    %937 = vmatprep.subr.mxu0 %v267
    %938 = vmatpush1.msra.mxu0 %v266
    %939 = vmatprep.subr.mxu0 %v271
    %940 = vmatpush1.msra.mxu0 %v270
    %941 = vmatprep.subr.mxu0 %v275
    %942 = vmatpush1.msra.mxu0 %v274
    %943 = vmatprep.subr.mxu0 %v279
    %944 = vmatpush1.msra.mxu0 %v278
    %945 = vmatprep.subr.mxu0 %v283
    %946 = vmatpush1.msra.mxu0 %v282
    %947 = vmatprep.subr.mxu0 %v287
    %948 = vmatpush1.msra.mxu0 %v286
    %949 = vmatprep.subr.mxu0 %v291
    %950 = vmatpush1.msra.mxu0 %v290
    %951 = vmatprep.subr.mxu0 %v295
    %952 = vmatpush1.msra.mxu0 %v294
    %953 = vmatprep.subr.mxu0 %v299
    %954 = vmatpush1.msra.mxu0 %v298
    %955 = vmatprep.subr.mxu0 %v303
    %956 = vmatpush1.msra.mxu0 %v302
    %957 = vmatprep.subr.mxu0 %v307
    %958 = vmatpush1.msra.mxu0 %v306
    %959 = vmatprep.subr.mxu0 %v311
    %960 = vmatpush1.msra.mxu0 %v310
    %961 = vmatprep.subr.mxu0 0.0
    %962 = vmatpush1.msra.mxu0 0.0
    %963 = vmatprep.subr.mxu0 0.0
    %964 = vmatpush1.msra.mxu0 0.0
    %965 = vmatprep.subr.mxu0 0.0
    %966 = vmatpush1.msra.mxu0 0.0
    %967 = vmatprep.subr.mxu0 0.0
    %968 = vmatpush1.msra.mxu0 0.0
    %969 = vmatprep.subr.mxu0 0.0
    %970 = vmatpush1.msra.mxu0 0.0
    %971 = vmatprep.subr.mxu0 0.0
    %972 = vmatpush1.msra.mxu0 0.0
    %973 = vmatprep.subr.mxu0 0.0
    %974 = vmatpush1.msra.mxu0 0.0
    %975 = vmatprep.subr.mxu0 0.0
    %976 = vmatpush1.msra.mxu0 0.0
    %977 = vmatprep.subr.mxu0 0.0
    %978 = vmatpush1.msra.mxu0 0.0
    %979 = vmatprep.subr.mxu0 0.0
    %980 = vmatpush1.msra.mxu0 0.0
    %981 = vmatprep.subr.mxu0 0.0
    %982 = vmatpush1.msra.mxu0 0.0
    %983 = vmatprep.subr.mxu0 0.0
    %984 = vmatpush1.msra.mxu0 0.0
    %985 = vmatprep.subr.mxu0 0.0
    %986 = vmatpush1.msra.mxu0 0.0
    %987 = vmatprep.subr.mxu0 0.0
    %988 = vmatpush1.msra.mxu0 0.0
    %989 = vmatprep.subr.mxu0 0.0
    %990 = vmatpush1.msra.mxu0 0.0
    %991 = vmatprep.subr.mxu0 0.0
    %992 = vmatpush1.msra.mxu0 0.0
    %993 = vmatprep.mubr.f32.mxu0 0.0
    %994 = vmatmul.mubr.f32.gmra.mrb[0].mxu0 %v856
    %v995 = vpop.f32.mrb[0].mxu0
    %v996 = vadd.f32 0.0, %v995
    %v997 = vpop.f32.mrb[0].mxu0
    %v998 = vadd.f32 0.0, %v997
    %999 = vdwg.mxu0
    %v1004 = vrot.slane %v925, 5
    %v1005 = vrot.slane %v927, 5
    %v1006 = vrot.slane %v996, 5
    %v1007 = vrot.slane %v998, 5
    %v1012 = vadd.f32 %v173, %v1004
    %v1013 = vadd.f32 %v175, %v1005
    %v1014 = vadd.f32 %v244, %v1006
    %v1015 = vadd.f32 %v246, %v1007
    %v1016 = vxor.u32 %v1012, 2147483648
    %v1017 = vxor.u32 %v1013, 2147483648
    %v1018 = vxor.u32 %v1014, 2147483648
    %v1019 = vmul.f32 %v1016, 1.442695
    %v1020 = vpow.pop %v1019
    %v1021 = vmul.f32 %v1017, 1.442695
    %v1022 = vpow.pop %v1021
    %v1023 = vmul.f32 %v1018, 1.442695
    %v1024 = vpow.pop %v1023
    %v1025 = vadd.f32 %v1020, 1.0
    %v1026 = vadd.f32 %v1022, 1.0
    %v1027 = vadd.f32 %v1024, 1.0
    %v1028 = vrcp.pop %v1025
    %v1029 = vmul.f32 1.0, %v1028
    %v1030 = vrcp.pop %v1026
    %v1031 = vmul.f32 1.0, %v1030
    %v1032 = vrcp.pop %v1027
    %v1033 = vmul.f32 1.0, %v1032
    %v1034 = vtanh.pop %v1015
    %v1036 = vrot.slane %v852, 7
    %v1038 = vmul.f32 %v1031, %v1036
    %v1039 = vmul.f32 %v1029, %v1034
    %v1040 = vadd.f32 %v1038, %v1039
    %v1041 = vtanh.pop %v1040
    %v1042 = vmul.f32 %v1033, %v1041
    %v1044 = vrot.slane %v1042, 3
    %1046 = vmatprep.subr.mxu0 %v249
    %1047 = vmatpush1.msra.mxu0 %v248
    %1048 = vmatprep.subr.mxu0 %v253
    %1049 = vmatpush1.msra.mxu0 %v252
    %1050 = vmatprep.subr.mxu0 %v257
    %1051 = vmatpush1.msra.mxu0 %v256
    %1052 = vmatprep.subr.mxu0 %v261
    %1053 = vmatpush1.msra.mxu0 %v260
    %1054 = vmatprep.subr.mxu0 %v265
    %1055 = vmatpush1.msra.mxu0 %v264
    %1056 = vmatprep.subr.mxu0 %v269
    %1057 = vmatpush1.msra.mxu0 %v268
    %1058 = vmatprep.subr.mxu0 %v273
    %1059 = vmatpush1.msra.mxu0 %v272
    %1060 = vmatprep.subr.mxu0 %v277
    %1061 = vmatpush1.msra.mxu0 %v276
    %1062 = vmatprep.subr.mxu0 %v281
    %1063 = vmatpush1.msra.mxu0 %v280
    %1064 = vmatprep.subr.mxu0 %v285
    %1065 = vmatpush1.msra.mxu0 %v284
    %1066 = vmatprep.subr.mxu0 %v289
    %1067 = vmatpush1.msra.mxu0 %v288
    %1068 = vmatprep.subr.mxu0 %v293
    %1069 = vmatpush1.msra.mxu0 %v292
    %1070 = vmatprep.subr.mxu0 %v297
    %1071 = vmatpush1.msra.mxu0 %v296
    %1072 = vmatprep.subr.mxu0 %v301
    %1073 = vmatpush1.msra.mxu0 %v300
    %1074 = vmatprep.subr.mxu0 %v305
    %1075 = vmatpush1.msra.mxu0 %v304
    %1076 = vmatprep.subr.mxu0 %v309
    %1077 = vmatpush1.msra.mxu0 %v308
    %1078 = vmatprep.subr.mxu0 0.0
    %1079 = vmatpush1.msra.mxu0 0.0
    %1080 = vmatprep.subr.mxu0 0.0
    %1081 = vmatpush1.msra.mxu0 0.0
    %1082 = vmatprep.subr.mxu0 0.0
    %1083 = vmatpush1.msra.mxu0 0.0
    %1084 = vmatprep.subr.mxu0 0.0
    %1085 = vmatpush1.msra.mxu0 0.0
    %1086 = vmatprep.subr.mxu0 0.0
    %1087 = vmatpush1.msra.mxu0 0.0
    %1088 = vmatprep.subr.mxu0 0.0
    %1089 = vmatpush1.msra.mxu0 0.0
    %1090 = vmatprep.subr.mxu0 0.0
    %1091 = vmatpush1.msra.mxu0 0.0
    %1092 = vmatprep.subr.mxu0 0.0
    %1093 = vmatpush1.msra.mxu0 0.0
    %1094 = vmatprep.subr.mxu0 0.0
    %1095 = vmatpush1.msra.mxu0 0.0
    %1096 = vmatprep.subr.mxu0 0.0
    %1097 = vmatpush1.msra.mxu0 0.0
    %1098 = vmatprep.subr.mxu0 0.0
    %1099 = vmatpush1.msra.mxu0 0.0
    %1100 = vmatprep.subr.mxu0 0.0
    %1101 = vmatpush1.msra.mxu0 0.0
    %1102 = vmatprep.subr.mxu0 0.0
    %1103 = vmatpush1.msra.mxu0 0.0
    %1104 = vmatprep.subr.mxu0 0.0
    %1105 = vmatpush1.msra.mxu0 0.0
    %1106 = vmatprep.subr.mxu0 0.0
    %1107 = vmatpush1.msra.mxu0 0.0
    %1108 = vmatprep.subr.mxu0 0.0
    %1109 = vmatpush1.msra.mxu0 0.0
    %1110 = vmatprep.mubr.f32.mxu0 0.0
    %1111 = vmatmul.mubr.f32.gmra.mrb[0].mxu0 %v1044
    %v1112 = vpop.f32.mrb[0].mxu0
    %v1113 = vadd.f32 0.0, %v1112
    %v1114 = vpop.f32.mrb[0].mxu0
    %v1115 = vadd.f32 0.0, %v1114
    %1116 = vdwg.mxu0
    %1117 = vmatprep.subr.mxu0 %v251
    %1118 = vmatpush1.msra.mxu0 %v250
    %1119 = vmatprep.subr.mxu0 %v255
    %1120 = vmatpush1.msra.mxu0 %v254
    %1121 = vmatprep.subr.mxu0 %v259
    %1122 = vmatpush1.msra.mxu0 %v258
    %1123 = vmatprep.subr.mxu0 %v263
    %1124 = vmatpush1.msra.mxu0 %v262
    %1125 = vmatprep.subr.mxu0 %v267
    %1126 = vmatpush1.msra.mxu0 %v266
    %1127 = vmatprep.subr.mxu0 %v271
    %1128 = vmatpush1.msra.mxu0 %v270
    %1129 = vmatprep.subr.mxu0 %v275
    %1130 = vmatpush1.msra.mxu0 %v274
    %1131 = vmatprep.subr.mxu0 %v279
    %1132 = vmatpush1.msra.mxu0 %v278
    %1133 = vmatprep.subr.mxu0 %v283
    %1134 = vmatpush1.msra.mxu0 %v282
    %1135 = vmatprep.subr.mxu0 %v287
    %1136 = vmatpush1.msra.mxu0 %v286
    %1137 = vmatprep.subr.mxu0 %v291
    %1138 = vmatpush1.msra.mxu0 %v290
    %1139 = vmatprep.subr.mxu0 %v295
    %1140 = vmatpush1.msra.mxu0 %v294
    %1141 = vmatprep.subr.mxu0 %v299
    %1142 = vmatpush1.msra.mxu0 %v298
    %1143 = vmatprep.subr.mxu0 %v303
    %1144 = vmatpush1.msra.mxu0 %v302
    %1145 = vmatprep.subr.mxu0 %v307
    %1146 = vmatpush1.msra.mxu0 %v306
    %1147 = vmatprep.subr.mxu0 %v311
    %1148 = vmatpush1.msra.mxu0 %v310
    %1149 = vmatprep.subr.mxu0 0.0
    %1150 = vmatpush1.msra.mxu0 0.0
    %1151 = vmatprep.subr.mxu0 0.0
    %1152 = vmatpush1.msra.mxu0 0.0
    %1153 = vmatprep.subr.mxu0 0.0
    %1154 = vmatpush1.msra.mxu0 0.0
    %1155 = vmatprep.subr.mxu0 0.0
    %1156 = vmatpush1.msra.mxu0 0.0
    %1157 = vmatprep.subr.mxu0 0.0
    %1158 = vmatpush1.msra.mxu0 0.0
    %1159 = vmatprep.subr.mxu0 0.0
    %1160 = vmatpush1.msra.mxu0 0.0
    %1161 = vmatprep.subr.mxu0 0.0
    %1162 = vmatpush1.msra.mxu0 0.0
    %1163 = vmatprep.subr.mxu0 0.0
    %1164 = vmatpush1.msra.mxu0 0.0
    %1165 = vmatprep.subr.mxu0 0.0
    %1166 = vmatpush1.msra.mxu0 0.0
    %1167 = vmatprep.subr.mxu0 0.0
    %1168 = vmatpush1.msra.mxu0 0.0
    %1169 = vmatprep.subr.mxu0 0.0
    %1170 = vmatpush1.msra.mxu0 0.0
    %1171 = vmatprep.subr.mxu0 0.0
    %1172 = vmatpush1.msra.mxu0 0.0
    %1173 = vmatprep.subr.mxu0 0.0
    %1174 = vmatpush1.msra.mxu0 0.0
    %1175 = vmatprep.subr.mxu0 0.0
    %1176 = vmatpush1.msra.mxu0 0.0
    %1177 = vmatprep.subr.mxu0 0.0
    %1178 = vmatpush1.msra.mxu0 0.0
    %1179 = vmatprep.subr.mxu0 0.0
    %1180 = vmatpush1.msra.mxu0 0.0
    %1181 = vmatprep.mubr.f32.mxu0 0.0
    %1182 = vmatmul.mubr.f32.gmra.mrb[0].mxu0 %v1044
    %v1183 = vpop.f32.mrb[0].mxu0
    %v1184 = vadd.f32 0.0, %v1183
    %v1185 = vpop.f32.mrb[0].mxu0
    %v1186 = vadd.f32 0.0, %v1185
    %1187 = vdwg.mxu0
    %v1192 = vrot.slane %v1113, 4
    %v1193 = vrot.slane %v1115, 4
    %v1194 = vrot.slane %v1184, 4
    %v1195 = vrot.slane %v1186, 4
    %v1200 = vadd.f32 %v173, %v1192
    %v1201 = vadd.f32 %v175, %v1193
    %v1202 = vadd.f32 %v244, %v1194
    %v1203 = vadd.f32 %v246, %v1195
    %v1204 = vxor.u32 %v1200, 2147483648
    %v1205 = vxor.u32 %v1201, 2147483648
    %v1206 = vxor.u32 %v1202, 2147483648
    %v1207 = vmul.f32 %v1204, 1.442695
    %v1208 = vpow.pop %v1207
    %v1209 = vmul.f32 %v1205, 1.442695
    %v1210 = vpow.pop %v1209
    %v1211 = vmul.f32 %v1206, 1.442695
    %v1212 = vpow.pop %v1211
    %v1213 = vadd.f32 %v1208, 1.0
    %v1214 = vadd.f32 %v1210, 1.0
    %v1215 = vadd.f32 %v1212, 1.0
    %v1216 = vrcp.pop %v1213
    %v1217 = vmul.f32 1.0, %v1216
    %v1218 = vrcp.pop %v1214
    %v1219 = vmul.f32 1.0, %v1218
    %v1220 = vrcp.pop %v1215
    %v1221 = vmul.f32 1.0, %v1220
    %v1222 = vtanh.pop %v1203
    %v1224 = vrot.slane %v1040, 7
    %v1226 = vmul.f32 %v1219, %v1224
    %v1227 = vmul.f32 %v1217, %v1222
    %v1228 = vadd.f32 %v1226, %v1227
    %v1229 = vtanh.pop %v1228
    %v1230 = vmul.f32 %v1221, %v1229
    %v1232 = vrot.slane %v1230, 4
    %1234 = vmatprep.subr.mxu0 %v249
    %1235 = vmatpush1.msra.mxu0 %v248
    %1236 = vmatprep.subr.mxu0 %v253
    %1237 = vmatpush1.msra.mxu0 %v252
    %1238 = vmatprep.subr.mxu0 %v257
    %1239 = vmatpush1.msra.mxu0 %v256
    %1240 = vmatprep.subr.mxu0 %v261
    %1241 = vmatpush1.msra.mxu0 %v260
    %1242 = vmatprep.subr.mxu0 %v265
    %1243 = vmatpush1.msra.mxu0 %v264
    %1244 = vmatprep.subr.mxu0 %v269
    %1245 = vmatpush1.msra.mxu0 %v268
    %1246 = vmatprep.subr.mxu0 %v273
    %1247 = vmatpush1.msra.mxu0 %v272
    %1248 = vmatprep.subr.mxu0 %v277
    %1249 = vmatpush1.msra.mxu0 %v276
    %1250 = vmatprep.subr.mxu0 %v281
    %1251 = vmatpush1.msra.mxu0 %v280
    %1252 = vmatprep.subr.mxu0 %v285
    %1253 = vmatpush1.msra.mxu0 %v284
    %1254 = vmatprep.subr.mxu0 %v289
    %1255 = vmatpush1.msra.mxu0 %v288
    %1256 = vmatprep.subr.mxu0 %v293
    %1257 = vmatpush1.msra.mxu0 %v292
    %1258 = vmatprep.subr.mxu0 %v297
    %1259 = vmatpush1.msra.mxu0 %v296
    %1260 = vmatprep.subr.mxu0 %v301
    %1261 = vmatpush1.msra.mxu0 %v300
    %1262 = vmatprep.subr.mxu0 %v305
    %1263 = vmatpush1.msra.mxu0 %v304
    %1264 = vmatprep.subr.mxu0 %v309
    %1265 = vmatpush1.msra.mxu0 %v308
    %1266 = vmatprep.subr.mxu0 0.0
    %1267 = vmatpush1.msra.mxu0 0.0
    %1268 = vmatprep.subr.mxu0 0.0
    %1269 = vmatpush1.msra.mxu0 0.0
    %1270 = vmatprep.subr.mxu0 0.0
    %1271 = vmatpush1.msra.mxu0 0.0
    %1272 = vmatprep.subr.mxu0 0.0
    %1273 = vmatpush1.msra.mxu0 0.0
    %1274 = vmatprep.subr.mxu0 0.0
    %1275 = vmatpush1.msra.mxu0 0.0
    %1276 = vmatprep.subr.mxu0 0.0
    %1277 = vmatpush1.msra.mxu0 0.0
    %1278 = vmatprep.subr.mxu0 0.0
    %1279 = vmatpush1.msra.mxu0 0.0
    %1280 = vmatprep.subr.mxu0 0.0
    %1281 = vmatpush1.msra.mxu0 0.0
    %1282 = vmatprep.subr.mxu0 0.0
    %1283 = vmatpush1.msra.mxu0 0.0
    %1284 = vmatprep.subr.mxu0 0.0
    %1285 = vmatpush1.msra.mxu0 0.0
    %1286 = vmatprep.subr.mxu0 0.0
    %1287 = vmatpush1.msra.mxu0 0.0
    %1288 = vmatprep.subr.mxu0 0.0
    %1289 = vmatpush1.msra.mxu0 0.0
    %1290 = vmatprep.subr.mxu0 0.0
    %1291 = vmatpush1.msra.mxu0 0.0
    %1292 = vmatprep.subr.mxu0 0.0
    %1293 = vmatpush1.msra.mxu0 0.0
    %1294 = vmatprep.subr.mxu0 0.0
    %1295 = vmatpush1.msra.mxu0 0.0
    %1296 = vmatprep.subr.mxu0 0.0
    %1297 = vmatpush1.msra.mxu0 0.0
    %1298 = vmatprep.mubr.f32.mxu0 0.0
    %1299 = vmatmul.mubr.f32.gmra.mrb[0].mxu0 %v1232
    %v1300 = vpop.f32.mrb[0].mxu0
    %v1301 = vadd.f32 0.0, %v1300
    %v1302 = vpop.f32.mrb[0].mxu0
    %v1303 = vadd.f32 0.0, %v1302
    %1304 = vdwg.mxu0
    %1305 = vmatprep.subr.mxu0 %v251
    %1306 = vmatpush1.msra.mxu0 %v250
    %1307 = vmatprep.subr.mxu0 %v255
    %1308 = vmatpush1.msra.mxu0 %v254
    %1309 = vmatprep.subr.mxu0 %v259
    %1310 = vmatpush1.msra.mxu0 %v258
    %1311 = vmatprep.subr.mxu0 %v263
    %1312 = vmatpush1.msra.mxu0 %v262
    %1313 = vmatprep.subr.mxu0 %v267
    %1314 = vmatpush1.msra.mxu0 %v266
    %1315 = vmatprep.subr.mxu0 %v271
    %1316 = vmatpush1.msra.mxu0 %v270
    %1317 = vmatprep.subr.mxu0 %v275
    %1318 = vmatpush1.msra.mxu0 %v274
    %1319 = vmatprep.subr.mxu0 %v279
    %1320 = vmatpush1.msra.mxu0 %v278
    %1321 = vmatprep.subr.mxu0 %v283
    %1322 = vmatpush1.msra.mxu0 %v282
    %1323 = vmatprep.subr.mxu0 %v287
    %1324 = vmatpush1.msra.mxu0 %v286
    %1325 = vmatprep.subr.mxu0 %v291
    %1326 = vmatpush1.msra.mxu0 %v290
    %1327 = vmatprep.subr.mxu0 %v295
    %1328 = vmatpush1.msra.mxu0 %v294
    %1329 = vmatprep.subr.mxu0 %v299
    %1330 = vmatpush1.msra.mxu0 %v298
    %1331 = vmatprep.subr.mxu0 %v303
    %1332 = vmatpush1.msra.mxu0 %v302
    %1333 = vmatprep.subr.mxu0 %v307
    %1334 = vmatpush1.msra.mxu0 %v306
    %1335 = vmatprep.subr.mxu0 %v311
    %1336 = vmatpush1.msra.mxu0 %v310
    %1337 = vmatprep.subr.mxu0 0.0
    %1338 = vmatpush1.msra.mxu0 0.0
    %1339 = vmatprep.subr.mxu0 0.0
    %1340 = vmatpush1.msra.mxu0 0.0
    %1341 = vmatprep.subr.mxu0 0.0
    %1342 = vmatpush1.msra.mxu0 0.0
    %1343 = vmatprep.subr.mxu0 0.0
    %1344 = vmatpush1.msra.mxu0 0.0
    %1345 = vmatprep.subr.mxu0 0.0
    %1346 = vmatpush1.msra.mxu0 0.0
    %1347 = vmatprep.subr.mxu0 0.0
    %1348 = vmatpush1.msra.mxu0 0.0
    %1349 = vmatprep.subr.mxu0 0.0
    %1350 = vmatpush1.msra.mxu0 0.0
    %1351 = vmatprep.subr.mxu0 0.0
    %1352 = vmatpush1.msra.mxu0 0.0
    %1353 = vmatprep.subr.mxu0 0.0
    %1354 = vmatpush1.msra.mxu0 0.0
    %1355 = vmatprep.subr.mxu0 0.0
    %1356 = vmatpush1.msra.mxu0 0.0
    %1357 = vmatprep.subr.mxu0 0.0
    %1358 = vmatpush1.msra.mxu0 0.0
    %1359 = vmatprep.subr.mxu0 0.0
    %1360 = vmatpush1.msra.mxu0 0.0
    %1361 = vmatprep.subr.mxu0 0.0
    %1362 = vmatpush1.msra.mxu0 0.0
    %1363 = vmatprep.subr.mxu0 0.0
    %1364 = vmatpush1.msra.mxu0 0.0
    %1365 = vmatprep.subr.mxu0 0.0
    %1366 = vmatpush1.msra.mxu0 0.0
    %1367 = vmatprep.subr.mxu0 0.0
    %1368 = vmatpush1.msra.mxu0 0.0
    %1369 = vmatprep.mubr.f32.mxu0 0.0
    %1370 = vmatmul.mubr.f32.gmra.mrb[0].mxu0 %v1232
    %v1371 = vpop.f32.mrb[0].mxu0
    %v1372 = vadd.f32 0.0, %v1371
    %v1373 = vpop.f32.mrb[0].mxu0
    %v1374 = vadd.f32 0.0, %v1373
    %1375 = vdwg.mxu0
    %v1380 = vrot.slane %v1301, 3
    %v1381 = vrot.slane %v1303, 3
    %v1382 = vrot.slane %v1372, 3
    %v1383 = vrot.slane %v1374, 3
    %v1388 = vadd.f32 %v173, %v1380
    %v1389 = vadd.f32 %v175, %v1381
    %v1390 = vadd.f32 %v244, %v1382
    %v1391 = vadd.f32 %v246, %v1383
    %v1392 = vxor.u32 %v1388, 2147483648
    %v1393 = vxor.u32 %v1389, 2147483648
    %v1394 = vxor.u32 %v1390, 2147483648
    %v1395 = vmul.f32 %v1392, 1.442695
    %v1396 = vpow.pop %v1395
    %v1397 = vmul.f32 %v1393, 1.442695
    %v1398 = vpow.pop %v1397
    %v1399 = vmul.f32 %v1394, 1.442695
    %v1400 = vpow.pop %v1399
    %v1401 = vadd.f32 %v1396, 1.0
    %v1402 = vadd.f32 %v1398, 1.0
    %v1403 = vadd.f32 %v1400, 1.0
    %v1404 = vrcp.pop %v1401
    %v1405 = vmul.f32 1.0, %v1404
    %v1406 = vrcp.pop %v1402
    %v1407 = vmul.f32 1.0, %v1406
    %v1408 = vrcp.pop %v1403
    %v1409 = vmul.f32 1.0, %v1408
    %v1410 = vtanh.pop %v1391
    %v1412 = vrot.slane %v1228, 7
    %v1414 = vmul.f32 %v1407, %v1412
    %v1415 = vmul.f32 %v1405, %v1410
    %v1416 = vadd.f32 %v1414, %v1415
    %v1417 = vtanh.pop %v1416
    %v1418 = vmul.f32 %v1409, %v1417
    %v1420 = vrot.slane %v1418, 5
    %1422 = vmatprep.subr.mxu0 %v249
    %1423 = vmatpush1.msra.mxu0 %v248
    %1424 = vmatprep.subr.mxu0 %v253
    %1425 = vmatpush1.msra.mxu0 %v252
    %1426 = vmatprep.subr.mxu0 %v257
    %1427 = vmatpush1.msra.mxu0 %v256
    %1428 = vmatprep.subr.mxu0 %v261
    %1429 = vmatpush1.msra.mxu0 %v260
    %1430 = vmatprep.subr.mxu0 %v265
    %1431 = vmatpush1.msra.mxu0 %v264
    %1432 = vmatprep.subr.mxu0 %v269
    %1433 = vmatpush1.msra.mxu0 %v268
    %1434 = vmatprep.subr.mxu0 %v273
    %1435 = vmatpush1.msra.mxu0 %v272
    %1436 = vmatprep.subr.mxu0 %v277
    %1437 = vmatpush1.msra.mxu0 %v276
    %1438 = vmatprep.subr.mxu0 %v281
    %1439 = vmatpush1.msra.mxu0 %v280
    %1440 = vmatprep.subr.mxu0 %v285
    %1441 = vmatpush1.msra.mxu0 %v284
    %1442 = vmatprep.subr.mxu0 %v289
    %1443 = vmatpush1.msra.mxu0 %v288
    %1444 = vmatprep.subr.mxu0 %v293
    %1445 = vmatpush1.msra.mxu0 %v292
    %1446 = vmatprep.subr.mxu0 %v297
    %1447 = vmatpush1.msra.mxu0 %v296
    %1448 = vmatprep.subr.mxu0 %v301
    %1449 = vmatpush1.msra.mxu0 %v300
    %1450 = vmatprep.subr.mxu0 %v305
    %1451 = vmatpush1.msra.mxu0 %v304
    %1452 = vmatprep.subr.mxu0 %v309
    %1453 = vmatpush1.msra.mxu0 %v308
    %1454 = vmatprep.subr.mxu0 0.0
    %1455 = vmatpush1.msra.mxu0 0.0
    %1456 = vmatprep.subr.mxu0 0.0
    %1457 = vmatpush1.msra.mxu0 0.0
    %1458 = vmatprep.subr.mxu0 0.0
    %1459 = vmatpush1.msra.mxu0 0.0
    %1460 = vmatprep.subr.mxu0 0.0
    %1461 = vmatpush1.msra.mxu0 0.0
    %1462 = vmatprep.subr.mxu0 0.0
    %1463 = vmatpush1.msra.mxu0 0.0
    %1464 = vmatprep.subr.mxu0 0.0
    %1465 = vmatpush1.msra.mxu0 0.0
    %1466 = vmatprep.subr.mxu0 0.0
    %1467 = vmatpush1.msra.mxu0 0.0
    %1468 = vmatprep.subr.mxu0 0.0
    %1469 = vmatpush1.msra.mxu0 0.0
    %1470 = vmatprep.subr.mxu0 0.0
    %1471 = vmatpush1.msra.mxu0 0.0
    %1472 = vmatprep.subr.mxu0 0.0
    %1473 = vmatpush1.msra.mxu0 0.0
    %1474 = vmatprep.subr.mxu0 0.0
    %1475 = vmatpush1.msra.mxu0 0.0
    %1476 = vmatprep.subr.mxu0 0.0
    %1477 = vmatpush1.msra.mxu0 0.0
    %1478 = vmatprep.subr.mxu0 0.0
    %1479 = vmatpush1.msra.mxu0 0.0
    %1480 = vmatprep.subr.mxu0 0.0
    %1481 = vmatpush1.msra.mxu0 0.0
    %1482 = vmatprep.subr.mxu0 0.0
    %1483 = vmatpush1.msra.mxu0 0.0
    %1484 = vmatprep.subr.mxu0 0.0
    %1485 = vmatpush1.msra.mxu0 0.0
    %1486 = vmatprep.mubr.f32.mxu0 0.0
    %1487 = vmatmul.mubr.f32.gmra.mrb[0].mxu0 %v1420
    %v1488 = vpop.f32.mrb[0].mxu0
    %v1489 = vadd.f32 0.0, %v1488
    %v1490 = vpop.f32.mrb[0].mxu0
    %v1491 = vadd.f32 0.0, %v1490
    %1492 = vdwg.mxu0
    %1493 = vmatprep.subr.mxu0 %v251
    %1494 = vmatpush1.msra.mxu0 %v250
    %1495 = vmatprep.subr.mxu0 %v255
    %1496 = vmatpush1.msra.mxu0 %v254
    %1497 = vmatprep.subr.mxu0 %v259
    %1498 = vmatpush1.msra.mxu0 %v258
    %1499 = vmatprep.subr.mxu0 %v263
    %1500 = vmatpush1.msra.mxu0 %v262
    %1501 = vmatprep.subr.mxu0 %v267
    %1502 = vmatpush1.msra.mxu0 %v266
    %1503 = vmatprep.subr.mxu0 %v271
    %1504 = vmatpush1.msra.mxu0 %v270
    %1505 = vmatprep.subr.mxu0 %v275
    %1506 = vmatpush1.msra.mxu0 %v274
    %1507 = vmatprep.subr.mxu0 %v279
    %1508 = vmatpush1.msra.mxu0 %v278
    %1509 = vmatprep.subr.mxu0 %v283
    %1510 = vmatpush1.msra.mxu0 %v282
    %1511 = vmatprep.subr.mxu0 %v287
    %1512 = vmatpush1.msra.mxu0 %v286
    %1513 = vmatprep.subr.mxu0 %v291
    %1514 = vmatpush1.msra.mxu0 %v290
    %1515 = vmatprep.subr.mxu0 %v295
    %1516 = vmatpush1.msra.mxu0 %v294
    %1517 = vmatprep.subr.mxu0 %v299
    %1518 = vmatpush1.msra.mxu0 %v298
    %1519 = vmatprep.subr.mxu0 %v303
    %1520 = vmatpush1.msra.mxu0 %v302
    %1521 = vmatprep.subr.mxu0 %v307
    %1522 = vmatpush1.msra.mxu0 %v306
    %1523 = vmatprep.subr.mxu0 %v311
    %1524 = vmatpush1.msra.mxu0 %v310
    %1525 = vmatprep.subr.mxu0 0.0
    %1526 = vmatpush1.msra.mxu0 0.0
    %1527 = vmatprep.subr.mxu0 0.0
    %1528 = vmatpush1.msra.mxu0 0.0
    %1529 = vmatprep.subr.mxu0 0.0
    %1530 = vmatpush1.msra.mxu0 0.0
    %1531 = vmatprep.subr.mxu0 0.0
    %1532 = vmatpush1.msra.mxu0 0.0
    %1533 = vmatprep.subr.mxu0 0.0
    %1534 = vmatpush1.msra.mxu0 0.0
    %1535 = vmatprep.subr.mxu0 0.0
    %1536 = vmatpush1.msra.mxu0 0.0
    %1537 = vmatprep.subr.mxu0 0.0
    %1538 = vmatpush1.msra.mxu0 0.0
    %1539 = vmatprep.subr.mxu0 0.0
    %1540 = vmatpush1.msra.mxu0 0.0
    %1541 = vmatprep.subr.mxu0 0.0
    %1542 = vmatpush1.msra.mxu0 0.0
    %1543 = vmatprep.subr.mxu0 0.0
    %1544 = vmatpush1.msra.mxu0 0.0
    %1545 = vmatprep.subr.mxu0 0.0
    %1546 = vmatpush1.msra.mxu0 0.0
    %1547 = vmatprep.subr.mxu0 0.0
    %1548 = vmatpush1.msra.mxu0 0.0
    %1549 = vmatprep.subr.mxu0 0.0
    %1550 = vmatpush1.msra.mxu0 0.0
    %1551 = vmatprep.subr.mxu0 0.0
    %1552 = vmatpush1.msra.mxu0 0.0
    %1553 = vmatprep.subr.mxu0 0.0
    %1554 = vmatpush1.msra.mxu0 0.0
    %1555 = vmatprep.subr.mxu0 0.0
    %1556 = vmatpush1.msra.mxu0 0.0
    %1557 = vmatprep.mubr.f32.mxu0 0.0
    %1558 = vmatmul.mubr.f32.gmra.mrb[0].mxu0 %v1420
    %v1559 = vpop.f32.mrb[0].mxu0
    %v1560 = vadd.f32 0.0, %v1559
    %v1561 = vpop.f32.mrb[0].mxu0
    %v1562 = vadd.f32 0.0, %v1561
    %1563 = vdwg.mxu0
    %v1568 = vrot.slane %v1489, 2
    %v1569 = vrot.slane %v1491, 2
    %v1570 = vrot.slane %v1560, 2
    %v1571 = vrot.slane %v1562, 2
    %v1576 = vadd.f32 %v173, %v1568
    %v1577 = vadd.f32 %v175, %v1569
    %v1578 = vadd.f32 %v244, %v1570
    %v1579 = vadd.f32 %v246, %v1571
    %v1580 = vxor.u32 %v1576, 2147483648
    %v1581 = vxor.u32 %v1577, 2147483648
    %v1582 = vxor.u32 %v1578, 2147483648
    %v1583 = vmul.f32 %v1580, 1.442695
    %v1584 = vpow.pop %v1583
    %v1585 = vmul.f32 %v1581, 1.442695
    %v1586 = vpow.pop %v1585
    %v1587 = vmul.f32 %v1582, 1.442695
    %v1588 = vpow.pop %v1587
    %v1589 = vadd.f32 %v1584, 1.0
    %v1590 = vadd.f32 %v1586, 1.0
    %v1591 = vadd.f32 %v1588, 1.0
    %v1592 = vrcp.pop %v1589
    %v1593 = vmul.f32 1.0, %v1592
    %v1594 = vrcp.pop %v1590
    %v1595 = vmul.f32 1.0, %v1594
    %v1596 = vrcp.pop %v1591
    %v1597 = vmul.f32 1.0, %v1596
    %v1598 = vtanh.pop %v1579
    %v1600 = vrot.slane %v1416, 7
    %v1602 = vmul.f32 %v1595, %v1600
    %v1603 = vmul.f32 %v1593, %v1598
    %v1604 = vadd.f32 %v1602, %v1603
    %v1605 = vtanh.pop %v1604
    %v1606 = vmul.f32 %v1597, %v1605
    %v1608 = vrot.slane %v1606, 6
    %1610 = vmatprep.subr.mxu0 %v249
    %1611 = vmatpush1.msra.mxu0 %v248
    %1612 = vmatprep.subr.mxu0 %v253
    %1613 = vmatpush1.msra.mxu0 %v252
    %1614 = vmatprep.subr.mxu0 %v257
    %1615 = vmatpush1.msra.mxu0 %v256
    %1616 = vmatprep.subr.mxu0 %v261
    %1617 = vmatpush1.msra.mxu0 %v260
    %1618 = vmatprep.subr.mxu0 %v265
    %1619 = vmatpush1.msra.mxu0 %v264
    %1620 = vmatprep.subr.mxu0 %v269
    %1621 = vmatpush1.msra.mxu0 %v268
    %1622 = vmatprep.subr.mxu0 %v273
    %1623 = vmatpush1.msra.mxu0 %v272
    %1624 = vmatprep.subr.mxu0 %v277
    %1625 = vmatpush1.msra.mxu0 %v276
    %1626 = vmatprep.subr.mxu0 %v281
    %1627 = vmatpush1.msra.mxu0 %v280
    %1628 = vmatprep.subr.mxu0 %v285
    %1629 = vmatpush1.msra.mxu0 %v284
    %1630 = vmatprep.subr.mxu0 %v289
    %1631 = vmatpush1.msra.mxu0 %v288
    %1632 = vmatprep.subr.mxu0 %v293
    %1633 = vmatpush1.msra.mxu0 %v292
    %1634 = vmatprep.subr.mxu0 %v297
    %1635 = vmatpush1.msra.mxu0 %v296
    %1636 = vmatprep.subr.mxu0 %v301
    %1637 = vmatpush1.msra.mxu0 %v300
    %1638 = vmatprep.subr.mxu0 %v305
    %1639 = vmatpush1.msra.mxu0 %v304
    %1640 = vmatprep.subr.mxu0 %v309
    %1641 = vmatpush1.msra.mxu0 %v308
    %1642 = vmatprep.subr.mxu0 0.0
    %1643 = vmatpush1.msra.mxu0 0.0
    %1644 = vmatprep.subr.mxu0 0.0
    %1645 = vmatpush1.msra.mxu0 0.0
    %1646 = vmatprep.subr.mxu0 0.0
    %1647 = vmatpush1.msra.mxu0 0.0
    %1648 = vmatprep.subr.mxu0 0.0
    %1649 = vmatpush1.msra.mxu0 0.0
    %1650 = vmatprep.subr.mxu0 0.0
    %1651 = vmatpush1.msra.mxu0 0.0
    %1652 = vmatprep.subr.mxu0 0.0
    %1653 = vmatpush1.msra.mxu0 0.0
    %1654 = vmatprep.subr.mxu0 0.0
    %1655 = vmatpush1.msra.mxu0 0.0
    %1656 = vmatprep.subr.mxu0 0.0
    %1657 = vmatpush1.msra.mxu0 0.0
    %1658 = vmatprep.subr.mxu0 0.0
    %1659 = vmatpush1.msra.mxu0 0.0
    %1660 = vmatprep.subr.mxu0 0.0
    %1661 = vmatpush1.msra.mxu0 0.0
    %1662 = vmatprep.subr.mxu0 0.0
    %1663 = vmatpush1.msra.mxu0 0.0
    %1664 = vmatprep.subr.mxu0 0.0
    %1665 = vmatpush1.msra.mxu0 0.0
    %1666 = vmatprep.subr.mxu0 0.0
    %1667 = vmatpush1.msra.mxu0 0.0
    %1668 = vmatprep.subr.mxu0 0.0
    %1669 = vmatpush1.msra.mxu0 0.0
    %1670 = vmatprep.subr.mxu0 0.0
    %1671 = vmatpush1.msra.mxu0 0.0
    %1672 = vmatprep.subr.mxu0 0.0
    %1673 = vmatpush1.msra.mxu0 0.0
    %1674 = vmatprep.mubr.f32.mxu0 0.0
    %1675 = vmatmul.mubr.f32.gmra.mrb[0].mxu0 %v1608
    %v1676 = vpop.f32.mrb[0].mxu0
    %v1677 = vadd.f32 0.0, %v1676
    %v1678 = vpop.f32.mrb[0].mxu0
    %v1679 = vadd.f32 0.0, %v1678
    %1680 = vdwg.mxu0
    %1681 = vmatprep.subr.mxu0 %v251
    %1682 = vmatpush1.msra.mxu0 %v250
    %1683 = vmatprep.subr.mxu0 %v255
    %1684 = vmatpush1.msra.mxu0 %v254
    %1685 = vmatprep.subr.mxu0 %v259
    %1686 = vmatpush1.msra.mxu0 %v258
    %1687 = vmatprep.subr.mxu0 %v263
    %1688 = vmatpush1.msra.mxu0 %v262
    %1689 = vmatprep.subr.mxu0 %v267
    %1690 = vmatpush1.msra.mxu0 %v266
    %1691 = vmatprep.subr.mxu0 %v271
    %1692 = vmatpush1.msra.mxu0 %v270
    %1693 = vmatprep.subr.mxu0 %v275
    %1694 = vmatpush1.msra.mxu0 %v274
    %1695 = vmatprep.subr.mxu0 %v279
    %1696 = vmatpush1.msra.mxu0 %v278
    %1697 = vmatprep.subr.mxu0 %v283
    %1698 = vmatpush1.msra.mxu0 %v282
    %1699 = vmatprep.subr.mxu0 %v287
    %1700 = vmatpush1.msra.mxu0 %v286
    %1701 = vmatprep.subr.mxu0 %v291
    %1702 = vmatpush1.msra.mxu0 %v290
    %1703 = vmatprep.subr.mxu0 %v295
    %1704 = vmatpush1.msra.mxu0 %v294
    %1705 = vmatprep.subr.mxu0 %v299
    %1706 = vmatpush1.msra.mxu0 %v298
    %1707 = vmatprep.subr.mxu0 %v303
    %1708 = vmatpush1.msra.mxu0 %v302
    %1709 = vmatprep.subr.mxu0 %v307
    %1710 = vmatpush1.msra.mxu0 %v306
    %1711 = vmatprep.subr.mxu0 %v311
    %1712 = vmatpush1.msra.mxu0 %v310
    %1713 = vmatprep.subr.mxu0 0.0
    %1714 = vmatpush1.msra.mxu0 0.0
    %1715 = vmatprep.subr.mxu0 0.0
    %1716 = vmatpush1.msra.mxu0 0.0
    %1717 = vmatprep.subr.mxu0 0.0
    %1718 = vmatpush1.msra.mxu0 0.0
    %1719 = vmatprep.subr.mxu0 0.0
    %1720 = vmatpush1.msra.mxu0 0.0
    %1721 = vmatprep.subr.mxu0 0.0
    %1722 = vmatpush1.msra.mxu0 0.0
    %1723 = vmatprep.subr.mxu0 0.0
    %1724 = vmatpush1.msra.mxu0 0.0
    %1725 = vmatprep.subr.mxu0 0.0
    %1726 = vmatpush1.msra.mxu0 0.0
    %1727 = vmatprep.subr.mxu0 0.0
    %1728 = vmatpush1.msra.mxu0 0.0
    %1729 = vmatprep.subr.mxu0 0.0
    %1730 = vmatpush1.msra.mxu0 0.0
    %1731 = vmatprep.subr.mxu0 0.0
    %1732 = vmatpush1.msra.mxu0 0.0
    %1733 = vmatprep.subr.mxu0 0.0
    %1734 = vmatpush1.msra.mxu0 0.0
    %1735 = vmatprep.subr.mxu0 0.0
    %1736 = vmatpush1.msra.mxu0 0.0
    %1737 = vmatprep.subr.mxu0 0.0
    %1738 = vmatpush1.msra.mxu0 0.0
    %1739 = vmatprep.subr.mxu0 0.0
    %1740 = vmatpush1.msra.mxu0 0.0
    %1741 = vmatprep.subr.mxu0 0.0
    %1742 = vmatpush1.msra.mxu0 0.0
    %1743 = vmatprep.subr.mxu0 0.0
    %1744 = vmatpush1.msra.mxu0 0.0
    %1745 = vmatprep.mubr.f32.mxu0 0.0
    %1746 = vmatmul.mubr.f32.gmra.mrb[0].mxu0 %v1608
    %v1747 = vpop.f32.mrb[0].mxu0
    %v1748 = vadd.f32 0.0, %v1747
    %v1749 = vpop.f32.mrb[0].mxu0
    %v1750 = vadd.f32 0.0, %v1749
    %1751 = vdwg.mxu0
    %v1756 = vrot.slane %v1677, 1
    %v1757 = vrot.slane %v1679, 1
    %v1758 = vrot.slane %v1748, 1
    %v1759 = vrot.slane %v1750, 1
    %v1764 = vadd.f32 %v173, %v1756
    %v1765 = vadd.f32 %v175, %v1757
    %v1766 = vadd.f32 %v244, %v1758
    %v1767 = vadd.f32 %v246, %v1759
    %v1768 = vxor.u32 %v1764, 2147483648
    %v1769 = vxor.u32 %v1765, 2147483648
    %v1770 = vxor.u32 %v1766, 2147483648
    %v1771 = vmul.f32 %v1768, 1.442695
    %v1772 = vpow.pop %v1771
    %v1773 = vmul.f32 %v1769, 1.442695
    %v1774 = vpow.pop %v1773
    %v1775 = vmul.f32 %v1770, 1.442695
    %v1776 = vpow.pop %v1775
    %v1777 = vadd.f32 %v1772, 1.0
    %v1778 = vadd.f32 %v1774, 1.0
    %v1779 = vadd.f32 %v1776, 1.0
    %v1780 = vrcp.pop %v1777
    %v1781 = vmul.f32 1.0, %v1780
    %v1782 = vrcp.pop %v1778
    %v1783 = vmul.f32 1.0, %v1782
    %v1784 = vrcp.pop %v1779
    %v1785 = vmul.f32 1.0, %v1784
    %v1786 = vtanh.pop %v1767
    %v1788 = vrot.slane %v1604, 7
    %v1790 = vmul.f32 %v1783, %v1788
    %v1791 = vmul.f32 %v1781, %v1786
    %v1792 = vadd.f32 %v1790, %v1791
    %v1793 = vtanh.pop %v1792
    %v1794 = vmul.f32 %v1785, %v1793
    %v1795 = vld [vmem:[#allocation5] sm:$0xff]
    %v1796 = vld [vmem:[#allocation5 + $0x8] sm:$0xff]
    %v1797 = vld [vmem:[#allocation5 + $0x10] sm:$0xff]
    %v1798 = vld [vmem:[#allocation5 + $0x18] sm:$0xff]
    %v1799 = vld [vmem:[#allocation5 + $0x20] sm:$0xff]
    %v1800 = vld [vmem:[#allocation5 + $0x28] sm:$0xff]
    %v1801 = vld [vmem:[#allocation5 + $0x30] sm:$0xff]
    %v1802 = vld [vmem:[#allocation5 + $0x38] sm:$0xff]
    %v1803 = vld [vmem:[#allocation5 + $0x40] sm:$0xff]
    %v1804 = vld [vmem:[#allocation5 + $0x48] sm:$0xff]
    %v1805 = vld [vmem:[#allocation5 + $0x50] sm:$0xff]
    %v1806 = vld [vmem:[#allocation5 + $0x58] sm:$0xff]
    %v1807 = vld [vmem:[#allocation5 + $0x60] sm:$0xff]
    %v1808 = vld [vmem:[#allocation5 + $0x68] sm:$0xff]
    %v1809 = vld [vmem:[#allocation5 + $0x70] sm:$0xff]
    %v1810 = vld [vmem:[#allocation5 + $0x78] sm:$0xff]
    %v1811 = vld [vmem:[%s5] sm:$0x1]
    %v1813 = vrot.slane %v1794, 7
    %1815 = vmatprep.subr.mxu0 0.0
    %1816 = vmatpush1.msra.mxu0 %v1795
    %1817 = vmatprep.subr.mxu0 0.0
    %1818 = vmatpush1.msra.mxu0 %v1796
    %1819 = vmatprep.subr.mxu0 0.0
    %1820 = vmatpush1.msra.mxu0 %v1797
    %1821 = vmatprep.subr.mxu0 0.0
    %1822 = vmatpush1.msra.mxu0 %v1798
    %1823 = vmatprep.subr.mxu0 0.0
    %1824 = vmatpush1.msra.mxu0 %v1799
    %1825 = vmatprep.subr.mxu0 0.0
    %1826 = vmatpush1.msra.mxu0 %v1800
    %1827 = vmatprep.subr.mxu0 0.0
    %1828 = vmatpush1.msra.mxu0 %v1801
    %1829 = vmatprep.subr.mxu0 0.0
    %1830 = vmatpush1.msra.mxu0 %v1802
    %1831 = vmatprep.subr.mxu0 0.0
    %1832 = vmatpush1.msra.mxu0 %v1803
    %1833 = vmatprep.subr.mxu0 0.0
    %1834 = vmatpush1.msra.mxu0 %v1804
    %1835 = vmatprep.subr.mxu0 0.0
    %1836 = vmatpush1.msra.mxu0 %v1805
    %1837 = vmatprep.subr.mxu0 0.0
    %1838 = vmatpush1.msra.mxu0 %v1806
    %1839 = vmatprep.subr.mxu0 0.0
    %1840 = vmatpush1.msra.mxu0 %v1807
    %1841 = vmatprep.subr.mxu0 0.0
    %1842 = vmatpush1.msra.mxu0 %v1808
    %1843 = vmatprep.subr.mxu0 0.0
    %1844 = vmatpush1.msra.mxu0 %v1809
    %1845 = vmatprep.subr.mxu0 0.0
    %1846 = vmatpush1.msra.mxu0 %v1810
    %1847 = vmatprep.subr.mxu0 0.0
    %1848 = vmatpush1.msra.mxu0 0.0
    %1849 = vmatprep.subr.mxu0 0.0
    %1850 = vmatpush1.msra.mxu0 0.0
    %1851 = vmatprep.subr.mxu0 0.0
    %1852 = vmatpush1.msra.mxu0 0.0
    %1853 = vmatprep.subr.mxu0 0.0
    %1854 = vmatpush1.msra.mxu0 0.0
    %1855 = vmatprep.subr.mxu0 0.0
    %1856 = vmatpush1.msra.mxu0 0.0
    %1857 = vmatprep.subr.mxu0 0.0
    %1858 = vmatpush1.msra.mxu0 0.0
    %1859 = vmatprep.subr.mxu0 0.0
    %1860 = vmatpush1.msra.mxu0 0.0
    %1861 = vmatprep.subr.mxu0 0.0
    %1862 = vmatpush1.msra.mxu0 0.0
    %1863 = vmatprep.subr.mxu0 0.0
    %1864 = vmatpush1.msra.mxu0 0.0
    %1865 = vmatprep.subr.mxu0 0.0
    %1866 = vmatpush1.msra.mxu0 0.0
    %1867 = vmatprep.subr.mxu0 0.0
    %1868 = vmatpush1.msra.mxu0 0.0
    %1869 = vmatprep.subr.mxu0 0.0
    %1870 = vmatpush1.msra.mxu0 0.0
    %1871 = vmatprep.subr.mxu0 0.0
    %1872 = vmatpush1.msra.mxu0 0.0
    %1873 = vmatprep.subr.mxu0 0.0
    %1874 = vmatpush1.msra.mxu0 0.0
    %1875 = vmatprep.subr.mxu0 0.0
    %1876 = vmatpush1.msra.mxu0 0.0
    %1877 = vmatprep.subr.mxu0 0.0
    %1878 = vmatpush1.msra.mxu0 0.0
    %1879 = vmatprep.mubr.f32.mxu0 0.0
    %1880 = vmatmul.mubr.f32.gmra.mrb[0].mxu0 %v1813
    %v1881 = vpop.f32.mrb[0].mxu0
    %v1882 = vadd.f32 %v1811, %v1881
    %v1883 = vpop.f32.mrb[0].mxu0
    %1884 = vdwg.mxu0
    %1885 = vst [vmem:[#allocation7] sm:$0x1] %v1882
    // Predicated region
    $region34: #{tpu_custom_call.1} parent=1 // pred_check
      _
    $region35: #{tpu_custom_call.1} parent=1 // pred_check_branch
      %1887 = sbr.rel (0) target = $region37
    $region36: #{tpu_custom_call.1} parent=1 // pred_region
      %s1889 = ssub.s32 16, 16
      %1890 = vsyncadd [#allocation4], %s1889
      %s1892 = sshll.u32 [#allocation7], 4
      %s1893 = int_to_ptr.vmem [resolvable:$true] %s1892
      %1895 = dma.vmem_to_hbm [thread:$0]  %s1893, 16, %s6, [#allocation4]
    $region37: #{tpu_custom_call.1} parent=1 // pred_fallthru
      _
    // Predicated region
    $region38: #{tpu_custom_call.1} parent=1 // pred_check
      _
    $region39: #{tpu_custom_call.1} parent=1 // pred_check_branch
      %1897 = sbr.rel (0) target = $region41
    $region40: #{tpu_custom_call.1} parent=1 // pred_region
      %1898 = dma.done [#allocation4], 16
    $region41: #{tpu_custom_call.1} parent=1 // pred_fallthru
      _
    %1899 = vsyncpa [#allocation3], 1
    %1900 = vsyncpa [#allocation6], 1
    %1901 = vsyncpa [#allocation4], 1

</llo_original>
